<compile_context>
chip_gen: v7x
topology: tpu7x:2x2x1
jax: 0.10.0
libtpu: 0.0.40
codegen_flags: <defaults>
</compile_context>

<pallas_src>
import functools

import jax
import jax.numpy as jnp
from jax import lax
from jax.experimental import pallas as pl
from jax.experimental.pallas import tpu as pltpu

INPUT_DIM = 32
HIDDEN = 200
FC1_DIM = 40
OUT_DIM = 1


def _classifier_lstm_kernel(x_ref, wg_ref, bg_ref, w1_ref, b1_ref,
                            w2_ref, b2_ref, out_ref):
    """Fused LSTM-cell (zero state) + fc1(relu) + fc2(tanh) for a tile of rows.

    Rows-along-lanes layout:
      x_ref  : (TM, 32)        wg/bg : (600, 32) / (600, 1)   rows = [i | o | g]
      w1/b1  : (40, 200) / (40, 1)
      w2/b2  : (40, 1)   / (1, 1)
      out    : (1, TM)
    """
    x = x_ref[...]                                                  # (TM, 32)

    # One fused gate matmul: (600, 32) contracted with (TM, 32) over dim 1.
    gates = lax.dot_general(
        wg_ref[...], x,
        dimension_numbers=(((1,), (1,)), ((), ())),
        preferred_element_type=jnp.float32) + bg_ref[...]           # (600, TM)

    # sigmoid(z) = 0.5 * tanh(0.5 * z) + 0.5  (single EUP push per element).
    sig = 0.5 * jnp.tanh(0.5 * gates[:2 * HIDDEN]) + 0.5            # (400, TM)
    g_g = jnp.tanh(gates[2 * HIDDEN:])                              # (200, TM)
    i_g = sig[:HIDDEN]                                              # (200, TM)
    o_g = sig[HIDDEN:]                                              # (200, TM)

    h = o_g * jnp.tanh(i_g * g_g)                                   # (200, TM)

    # TODO(synk): dropout (p=0.5) is identity in eval mode; not implemented for training.
    fc1 = jnp.maximum(
        jnp.dot(w1_ref[...], h, preferred_element_type=jnp.float32)
        + b1_ref[...],
        0.0)                                                        # (40, TM)

    # fc2 as broadcast-multiply + sublane reduce (avoids an M=1 matmul).
    out = jnp.tanh(
        jnp.sum(w2_ref[...] * fc1, axis=0, keepdims=True) + b2_ref[...])  # (1, TM)

    out_ref[...] = out.astype(out_ref.dtype)


def _round128(n):
    return ((n + 127) // 128) * 128


def _pick_tile(n_rows, tile_rows):
    """Pick a 128-multiple row tile; for N >= 256 force an even tile count so
    the parallel grid axis can shard across both v7x TensorCores."""
    if n_rows < 256:
        return max(128, _round128(n_rows))
    pairs = -(-n_rows // (2 * tile_rows))           # cdiv
    return min(tile_rows, _round128(-(-n_rows // (2 * pairs))))


@functools.partial(jax.jit, static_argnames=("tile_rows",))
def classifier_lstm_forward(tactiles, params, *, tile_rows=1024):
    """tactiles: (seq_len, batch, 32) float32 -> (seq_len, batch, 1) float32."""
    T, B, D = tactiles.shape
    assert D == INPUT_DIM
    N = T * B

    tm = _pick_tile(N, tile_rows)
    n_tiles = -(-N // tm)
    n_pad = n_tiles * tm

    # Input stays (N, 32); only a single row-pad, no wrapper-side transpose.
    x = tactiles.reshape(N, D).astype(jnp.float32)
    if n_pad != N:
        x = jnp.pad(x, ((0, n_pad - N), (0, 0)))

    # Weight prep: drop forget gate entirely (exact: c0 == 0); fuse i/o/g into
    # one matrix with the two sigmoid gates first so activation slices are
    # sublane-aligned.  PyTorch gate order in w_ih is [i, f, g, o].
    w_ih = params["w_ih"]                                           # (800, 32)
    b_gate = params["b_ih"] + params["b_hh"]                        # (800,)
    w_igo = jnp.concatenate(
        [w_ih[0 * HIDDEN:1 * HIDDEN],      # i  (sigmoid)
         w_ih[3 * HIDDEN:4 * HIDDEN],      # o  (sigmoid)
         w_ih[2 * HIDDEN:3 * HIDDEN]],     # g  (tanh)
        axis=0)                                                     # (600, 32)
    b_igo = jnp.concatenate(
        [b_gate[0 * HIDDEN:1 * HIDDEN],
         b_gate[3 * HIDDEN:4 * HIDDEN],
         b_gate[2 * HIDDEN:3 * HIDDEN]]).reshape(3 * HIDDEN, 1)     # (600, 1)

    w1 = params["w_fc1"]                                            # (40, 200)
    b1 = params["b_fc1"].reshape(FC1_DIM, 1)                        # (40, 1)
    w2 = params["w_fc2"].reshape(FC1_DIM, OUT_DIM)                  # (40, 1)
    b2 = params["b_fc2"].reshape(OUT_DIM, 1)                        # (1, 1)

    resident = lambda i: (0, 0)   # weights/biases stay in VMEM across the grid

    out = pl.pallas_call(
        _classifier_lstm_kernel,
        out_shape=jax.ShapeDtypeStruct((1, n_pad), jnp.float32),
        grid_spec=pltpu.PrefetchScalarGridSpec(
            num_scalar_prefetch=0,
            grid=(n_tiles,),
            in_specs=[
                pl.BlockSpec((tm, D), lambda i: (i, 0)),            # x tile
                pl.BlockSpec((3 * HIDDEN, D), resident),            # W_igo
                pl.BlockSpec((3 * HIDDEN, 1), resident),            # b_igo
                pl.BlockSpec((FC1_DIM, HIDDEN), resident),          # W1
                pl.BlockSpec((FC1_DIM, 1), resident),               # b1
                pl.BlockSpec((FC1_DIM, OUT_DIM), resident),         # W2 (40, 1)
                pl.BlockSpec((OUT_DIM, 1), resident),               # b2
            ],
            out_specs=pl.BlockSpec((1, tm), lambda i: (0, i)),      # lane-dense out
        ),
        compiler_params=pltpu.CompilerParams(
            dimension_semantics=("parallel",)),
    )(x, w_igo, b_igo, w1, b1, w2, b2)

    return out[0, :N].reshape(T, B, OUT_DIM)


def init_params(key):
    """Deterministic PyTorch-style uniform(-k, k) init for all parameters."""
    ks = jax.random.split(key, 8)

    k_lstm = 1.0 / jnp.sqrt(HIDDEN)
    k_fc1 = 1.0 / jnp.sqrt(HIDDEN)
    k_fc2 = 1.0 / jnp.sqrt(FC1_DIM)

    params = {
        # nn.LSTM(32, 200): weight_ih (800,32), weight_hh (800,200), biases (800,)
        "w_ih": jax.random.uniform(ks[0], (4 * HIDDEN, INPUT_DIM),
                                   minval=-k_lstm, maxval=k_lstm, dtype=jnp.float32),
        "w_hh": jax.random.uniform(ks[1], (4 * HIDDEN, HIDDEN),
                                   minval=-k_lstm, maxval=k_lstm, dtype=jnp.float32),
        "b_ih": jax.random.uniform(ks[2], (4 * HIDDEN,),
                                   minval=-k_lstm, maxval=k_lstm, dtype=jnp.float32),
        "b_hh": jax.random.uniform(ks[3], (4 * HIDDEN,),
                                   minval=-k_lstm, maxval=k_lstm, dtype=jnp.float32),
        # nn.Linear(200, 40)
        "w_fc1": jax.random.uniform(ks[4], (FC1_DIM, HIDDEN),
                                    minval=-k_fc1, maxval=k_fc1, dtype=jnp.float32),
        "b_fc1": jax.random.uniform(ks[5], (FC1_DIM,),
                                    minval=-k_fc1, maxval=k_fc1, dtype=jnp.float32),
        # nn.Linear(40, 1)
        "w_fc2": jax.random.uniform(ks[6], (OUT_DIM, FC1_DIM),
                                    minval=-k_fc2, maxval=k_fc2, dtype=jnp.float32),
        "b_fc2": jax.random.uniform(ks[7], (OUT_DIM,),
                                    minval=-k_fc2, maxval=k_fc2, dtype=jnp.float32),
    }
    return params


def _reference_forward(tactiles, params):
    """Pure-JAX reference of the exact PyTorch forward (eval mode)."""
    T, B, D = tactiles.shape
    x = tactiles.reshape(T * B, D)
    gates = x @ params["w_ih"].T + params["b_ih"] + params["b_hh"]
    i_g = jax.nn.sigmoid(gates[:, 0 * HIDDEN:1 * HIDDEN])
    g_g = jnp.tanh(gates[:, 2 * HIDDEN:3 * HIDDEN])
    o_g = jax.nn.sigmoid(gates[:, 3 * HIDDEN:4 * HIDDEN])
    h = o_g * jnp.tanh(i_g * g_g)
    fc1 = jnp.maximum(h @ params["w_fc1"].T + params["b_fc1"], 0.0)
    out = jnp.tanh(fc1 @ params["w_fc2"].T + params["b_fc2"])
    return out.reshape(T, B, OUT_DIM)


if __name__ == "__main__":
    key = jax.random.PRNGKey(0)
    k_param, k_input = jax.random.split(key)

    seq_len, batch = 8, 2
    tactiles = jax.random.normal(k_input, (seq_len, batch, INPUT_DIM),
                                 dtype=jnp.float32)
    params = init_params(k_param)

    out = classifier_lstm_forward(tactiles, params)
    out = jax.block_until_ready(out)

    ref = _reference_forward(tactiles, params)
    assert out.shape == (seq_len, batch, 1)
    assert jnp.allclose(out, ref, atol=1e-5, rtol=1e-5)

    print("KERNEL_OK")
</pallas_src>

<mosaic_0001>
module attributes {stable_mosaic.version = 11 : i64} {
  func.func @_classifier_lstm_kernel(%arg0: i32, %arg1: memref<128x32xf32, #tpu.memory_space<vmem>>, %arg2: memref<600x32xf32, #tpu.memory_space<vmem>>, %arg3: memref<600x1xf32, #tpu.memory_space<vmem>>, %arg4: memref<40x200xf32, #tpu.memory_space<vmem>>, %arg5: memref<40x1xf32, #tpu.memory_space<vmem>>, %arg6: memref<40x1xf32, #tpu.memory_space<vmem>>, %arg7: memref<1x1xf32, #tpu.memory_space<vmem>>, %arg8: memref<1x128xf32, #tpu.memory_space<vmem>>) attributes {dimension_semantics = [#tpu.dimension_semantics<parallel>], iteration_bounds = array<i64: 1>, scalar_prefetch = 0 : i64, scratch_operands = 0 : i64, tpu.core_type = #tpu.core_type<tc>, window_params = [{transform_indices = @transform_0, window_bounds = array<i64: 128, 32>}, {pipeline_mode = #tpu.pipeline_mode<synchronous>, transform_indices = @transform_1, window_bounds = array<i64: 600, 32>}, {pipeline_mode = #tpu.pipeline_mode<synchronous>, transform_indices = @transform_2, window_bounds = array<i64: 600, 1>}, {pipeline_mode = #tpu.pipeline_mode<synchronous>, transform_indices = @transform_3, window_bounds = array<i64: 40, 200>}, {pipeline_mode = #tpu.pipeline_mode<synchronous>, transform_indices = @transform_4, window_bounds = array<i64: 40, 1>}, {pipeline_mode = #tpu.pipeline_mode<synchronous>, transform_indices = @transform_5, window_bounds = array<i64: 40, 1>}, {pipeline_mode = #tpu.pipeline_mode<synchronous>, transform_indices = @transform_6, window_bounds = array<i64: 1, 1>}, {transform_indices = @transform_7, window_bounds = array<i64: 1, 128>}]} {
    %c0 = arith.constant 0 : index
    %c0_0 = arith.constant 0 : index
    %0 = vector.load %arg1[%c0, %c0_0] : memref<128x32xf32, #tpu.memory_space<vmem>>, vector<128x32xf32>
    %c0_1 = arith.constant 0 : index
    %c0_2 = arith.constant 0 : index
    %1 = vector.load %arg2[%c0_1, %c0_2] : memref<600x32xf32, #tpu.memory_space<vmem>>, vector<600x32xf32>
    %cst = arith.constant dense<0.000000e+00> : vector<600x128xf32>
    %2 = tpu.matmul %1, %0, %cst {dimension_numbers = #tpu.dot_dimension_numbers<[1], [1], [0], [0], [0, 0, 1, 0], [], []>} : vector<600x32xf32>, vector<128x32xf32>, vector<600x128xf32> -> vector<600x128xf32>
    %c0_3 = arith.constant 0 : index
    %c0_4 = arith.constant 0 : index
    %3 = vector.load %arg3[%c0_3, %c0_4] : memref<600x1xf32, #tpu.memory_space<vmem>>, vector<600x1xf32>
    %4 = vector.broadcast %3 : vector<600x1xf32> to vector<600x128xf32>
    %5 = arith.addf %2, %4 : vector<600x128xf32>
    %6 = vector.extract_strided_slice %5 {offsets = [0, 0], sizes = [400, 128], strides = [1, 1]} : vector<600x128xf32> to vector<400x128xf32>
    %cst_5 = arith.constant 5.000000e-01 : f32
    %7 = vector.broadcast %cst_5 : f32 to vector<400x128xf32>
    %8 = arith.mulf %7, %6 : vector<400x128xf32>
    %9 = math.tanh %8 : vector<400x128xf32>
    %cst_6 = arith.constant 5.000000e-01 : f32
    %10 = vector.broadcast %cst_6 : f32 to vector<400x128xf32>
    %11 = arith.mulf %10, %9 : vector<400x128xf32>
    %cst_7 = arith.constant 5.000000e-01 : f32
    %12 = vector.broadcast %cst_7 : f32 to vector<400x128xf32>
    %13 = arith.addf %11, %12 : vector<400x128xf32>
    %14 = vector.extract_strided_slice %5 {offsets = [400, 0], sizes = [200, 128], strides = [1, 1]} : vector<600x128xf32> to vector<200x128xf32>
    %15 = math.tanh %14 : vector<200x128xf32>
    %16 = vector.extract_strided_slice %13 {offsets = [0, 0], sizes = [200, 128], strides = [1, 1]} : vector<400x128xf32> to vector<200x128xf32>
    %17 = vector.extract_strided_slice %13 {offsets = [200, 0], sizes = [200, 128], strides = [1, 1]} : vector<400x128xf32> to vector<200x128xf32>
    %18 = arith.mulf %16, %15 : vector<200x128xf32>
    %19 = math.tanh %18 : vector<200x128xf32>
    %20 = arith.mulf %17, %19 : vector<200x128xf32>
    %c0_8 = arith.constant 0 : index
    %c0_9 = arith.constant 0 : index
    %21 = vector.load %arg4[%c0_8, %c0_9] : memref<40x200xf32, #tpu.memory_space<vmem>>, vector<40x200xf32>
    %cst_10 = arith.constant dense<0.000000e+00> : vector<40x128xf32>
    %22 = tpu.matmul %21, %20, %cst_10 {dimension_numbers = #tpu.dot_dimension_numbers<[1], [0], [0], [1], [0, 0, 1, 1], [], []>} : vector<40x200xf32>, vector<200x128xf32>, vector<40x128xf32> -> vector<40x128xf32>
    %c0_11 = arith.constant 0 : index
    %c0_12 = arith.constant 0 : index
    %23 = vector.load %arg5[%c0_11, %c0_12] : memref<40x1xf32, #tpu.memory_space<vmem>>, vector<40x1xf32>
    %24 = vector.broadcast %23 : vector<40x1xf32> to vector<40x128xf32>
    %25 = arith.addf %22, %24 : vector<40x128xf32>
    %cst_13 = arith.constant 0.000000e+00 : f32
    %26 = vector.broadcast %cst_13 : f32 to vector<40x128xf32>
    %27 = arith.maximumf %25, %26 : vector<40x128xf32>
    %c0_14 = arith.constant 0 : index
    %c0_15 = arith.constant 0 : index
    %28 = vector.load %arg6[%c0_14, %c0_15] : memref<40x1xf32, #tpu.memory_space<vmem>>, vector<40x1xf32>
    %29 = vector.broadcast %28 : vector<40x1xf32> to vector<40x128xf32>
    %30 = arith.mulf %29, %27 : vector<40x128xf32>
    %cst_16 = arith.constant dense<0.000000e+00> : vector<128xf32>
    %31 = vector.multi_reduction <add>, %30, %cst_16 [0] : vector<40x128xf32> to vector<128xf32>
    %32 = vector.shape_cast %31 : vector<128xf32> to vector<1x128xf32>
    %c0_17 = arith.constant 0 : index
    %c0_18 = arith.constant 0 : index
    %33 = vector.load %arg7[%c0_17, %c0_18] : memref<1x1xf32, #tpu.memory_space<vmem>>, vector<1x1xf32>
    %34 = vector.broadcast %33 : vector<1x1xf32> to vector<1x128xf32>
    %35 = arith.addf %32, %34 : vector<1x128xf32>
    %36 = math.tanh %35 : vector<1x128xf32>
    %c0_19 = arith.constant 0 : index
    %c0_20 = arith.constant 0 : index
    %37 = vector.load %arg8[%c0_19, %c0_20] : memref<1x128xf32, #tpu.memory_space<vmem>>, vector<1x128xf32>
    tpu.vector_store %arg8[%c0_19, %c0_20], %36 {strides = array<i32>} : memref<1x128xf32, #tpu.memory_space<vmem>>, vector<1x128xf32>,
    return
  }
  func.func @transform_0(%arg0: i32) -> (i32, i32) {
    %c0_i32 = arith.constant 0 : i32
    %c0_i32_0 = arith.constant 0 : i32
    return %arg0, %c0_i32 : i32, i32
  }
  func.func @transform_1(%arg0: i32) -> (i32, i32) {
    %c0_i32 = arith.constant 0 : i32
    %c0_i32_0 = arith.constant 0 : i32
    %c0_i32_1 = arith.constant 0 : i32
    return %c0_i32, %c0_i32_0 : i32, i32
  }
  func.func @transform_2(%arg0: i32) -> (i32, i32) {
    %c0_i32 = arith.constant 0 : i32
    %c0_i32_0 = arith.constant 0 : i32
    %c0_i32_1 = arith.constant 0 : i32
    return %c0_i32, %c0_i32_0 : i32, i32
  }
  func.func @transform_3(%arg0: i32) -> (i32, i32) {
    %c0_i32 = arith.constant 0 : i32
    %c0_i32_0 = arith.constant 0 : i32
    %c0_i32_1 = arith.constant 0 : i32
    return %c0_i32, %c0_i32_0 : i32, i32
  }
  func.func @transform_4(%arg0: i32) -> (i32, i32) {
    %c0_i32 = arith.constant 0 : i32
    %c0_i32_0 = arith.constant 0 : i32
    %c0_i32_1 = arith.constant 0 : i32
    return %c0_i32, %c0_i32_0 : i32, i32
  }
  func.func @transform_5(%arg0: i32) -> (i32, i32) {
    %c0_i32 = arith.constant 0 : i32
    %c0_i32_0 = arith.constant 0 : i32
    %c0_i32_1 = arith.constant 0 : i32
    return %c0_i32, %c0_i32_0 : i32, i32
  }
  func.func @transform_6(%arg0: i32) -> (i32, i32) {
    %c0_i32 = arith.constant 0 : i32
    %c0_i32_0 = arith.constant 0 : i32
    %c0_i32_1 = arith.constant 0 : i32
    return %c0_i32, %c0_i32_0 : i32, i32
  }
  func.func @transform_7(%arg0: i32) -> (i32, i32) {
    %c0_i32 = arith.constant 0 : i32
    %c0_i32_0 = arith.constant 0 : i32
    return %c0_i32, %arg0 : i32, i32
  }
}

</mosaic_0001>

<llo_original>
// kernel: squeeze.1
$region0: #{squeeze.1}
  %s0 = inlined_call_operand.vmem [shape: f32[16], index: 0, kind: input, shape index: {}]
  %s1 = inlined_call_operand.vmem [shape: f32[8,2,1], index: 1, kind: output, shape index: {}]
  $region1: #{squeeze.1} parent=0
    #allocation0 [shape = 'u8[4096]{0}', space=vmem, size = 0x1000, scoped, tag = 'scoped mem for input reshape']
    %s3 = sshllo.u32 0, 1
    %v4 = vld [vmem:[%s0] sm:%s3]
    %5 = vst [vmem:[#allocation0] sm:%s3] %v4
    %v6 = vld [vmem:[#allocation0] sm:$0x1]
    %vm7 = vcmask 15360
    %8 = vst.msk [vmem:[%s1] sm:$0x1] %vm7, %v6
    %v9 = vld [vmem:[#allocation0] sm:$0x1]
    %10 = vrot.lane.b32.xlu0 %v9, 126
    %v11 = vpop.permute.xlu0 %10
    %vm12 = vcmask 15360
    %s13 = scalar_lea.vmem %s1, 1
    %14 = vst.msk [vmem:[%s13] sm:$0x1] %vm12, %v11
    %v15 = vld [vmem:[#allocation0] sm:$0x1]
    %16 = vrot.lane.b32.xlu0 %v15, 124
    %v17 = vpop.permute.xlu0 %16
    %vm18 = vcmask 15360
    %s19 = scalar_lea.vmem %s1, 2
    %20 = vst.msk [vmem:[%s19] sm:$0x1] %vm18, %v17
    %v21 = vld [vmem:[#allocation0] sm:$0x1]
    %22 = vrot.lane.b32.xlu0 %v21, 122
    %v23 = vpop.permute.xlu0 %22
    %vm24 = vcmask 15360
    %s25 = scalar_lea.vmem %s1, 3
    %26 = vst.msk [vmem:[%s25] sm:$0x1] %vm24, %v23
    %v27 = vld [vmem:[#allocation0] sm:$0x1]
    %28 = vrot.lane.b32.xlu0 %v27, 120
    %v29 = vpop.permute.xlu0 %28
    %vm30 = vcmask 15360
    %s31 = scalar_lea.vmem %s1, 4
    %32 = vst.msk [vmem:[%s31] sm:$0x1] %vm30, %v29
    %v33 = vld [vmem:[#allocation0] sm:$0x1]
    %34 = vrot.lane.b32.xlu0 %v33, 118
    %v35 = vpop.permute.xlu0 %34
    %vm36 = vcmask 15360
    %s37 = scalar_lea.vmem %s1, 5
    %38 = vst.msk [vmem:[%s37] sm:$0x1] %vm36, %v35
    %v39 = vld [vmem:[#allocation0] sm:$0x1]
    %40 = vrot.lane.b32.xlu0 %v39, 116
    %v41 = vpop.permute.xlu0 %40
    %vm42 = vcmask 15360
    %s43 = scalar_lea.vmem %s1, 6
    %44 = vst.msk [vmem:[%s43] sm:$0x1] %vm42, %v41
    %v45 = vld [vmem:[#allocation0] sm:$0x1]
    %46 = vrot.lane.b32.xlu0 %v45, 114
    %v47 = vpop.permute.xlu0 %46
    %vm48 = vcmask 15360
    %s49 = scalar_lea.vmem %s1, 7
    %50 = vst.msk [vmem:[%s49] sm:$0x1] %vm48, %v47

// kernel: classifier_lstm_forward.1
$region0: #{classifier_lstm_forward.1}
  #allocation0 [shape = 'u32[]', space=smem, size = 0x4, offset = 0x4, fixed_abs, tag = 'smem constant byte address 0x4 - core index']
  #allocation1 [shape = 'u32[144,128]{1,0:T(1,128)}', space=vmem, size = 0x12000, scoped, tag = 'internal scratch']
  #allocation2 [shape = 'f32[1,1]{1,0:T(1,128)S(1)}', space=vmem, size = 0x200, scoped, tag = 'scoped memory for classifier_lstm_forward.1']
  %s0 = inlined_call_operand.vmem [shape: f32[128,32], index: 0, kind: input, shape index: {}]
  %s1 = inlined_call_operand.vmem [shape: f32[600,32], index: 1, kind: input, shape index: {}]
  %s2 = inlined_call_operand.vmem [shape: f32[600,1], index: 2, kind: input, shape index: {}]
  %s3 = inlined_call_operand.vmem [shape: f32[40,200], index: 3, kind: input, shape index: {}]
  %s4 = inlined_call_operand.vmem [shape: f32[40,1], index: 4, kind: input, shape index: {}]
  %s5 = inlined_call_operand.vmem [shape: f32[40,1], index: 5, kind: input, shape index: {}]
  %s6 = inlined_call_operand.<no memory space> [shape: f32[1,1], index: 6, kind: input, shape index: {}]
  %s7 = inlined_call_operand.vmem [shape: f32[1,128], index: 7, kind: output, shape index: {}]
  %s8 = sld [smem:[#allocation0]]
  $region38: #{classifier_lstm_forward.1} parent=0
    _
  %s10 = ssub.s32 1, %s8
  %s11 = scalar_select 0, %s10, %s8
  %v12 = vstv %s6
  %13 = vst [vmem:[#allocation2] sm:$0x1] %v12
  // Predicated region
  $region2: #{classifier_lstm_forward.1} parent=0 // pred_check
    _
  $region3: #{classifier_lstm_forward.1} parent=0 // pred_check_branch
    %15 = sbr.rel (0) target = $region5
  $region4: #{classifier_lstm_forward.1} parent=0 // pred_region
    _
  $region5: #{classifier_lstm_forward.1} parent=0 // pred_fallthru
    _
  // Predicated region
  $region6: #{classifier_lstm_forward.1} parent=0 // pred_check
    _
  $region7: #{classifier_lstm_forward.1} parent=0 // pred_check_branch
    %17 = sbr.rel (0) target = $region9
  $region8: #{classifier_lstm_forward.1} parent=0 // pred_region
    _
  $region9: #{classifier_lstm_forward.1} parent=0 // pred_fallthru
    _
  // Predicated region
  $region10: #{classifier_lstm_forward.1} parent=0 // pred_check
    _
  $region11: #{classifier_lstm_forward.1} parent=0 // pred_check_branch
    %19 = sbr.rel (0) target = $region13
  $region12: #{classifier_lstm_forward.1} parent=0 // pred_region
    _
  $region13: #{classifier_lstm_forward.1} parent=0 // pred_fallthru
    _
  // Predicated region
  $region14: #{classifier_lstm_forward.1} parent=0 // pred_check
    _
  $region15: #{classifier_lstm_forward.1} parent=0 // pred_check_branch
    %21 = sbr.rel (0) target = $region17
  $region16: #{classifier_lstm_forward.1} parent=0 // pred_region
    _
  $region17: #{classifier_lstm_forward.1} parent=0 // pred_fallthru
    _
  // Predicated region
  $region18: #{classifier_lstm_forward.1} parent=0 // pred_check
    _
  $region19: #{classifier_lstm_forward.1} parent=0 // pred_check_branch
    %23 = sbr.rel (0) target = $region21
  $region20: #{classifier_lstm_forward.1} parent=0 // pred_region
    _
  $region21: #{classifier_lstm_forward.1} parent=0 // pred_fallthru
    _
  // Predicated region
  $region22: #{classifier_lstm_forward.1} parent=0 // pred_check
    _
  $region23: #{classifier_lstm_forward.1} parent=0 // pred_check_branch
    %25 = sbr.rel (0) target = $region25
  $region24: #{classifier_lstm_forward.1} parent=0 // pred_region
    _
  $region25: #{classifier_lstm_forward.1} parent=0 // pred_fallthru
    _
  // Predicated region
  $region26: #{classifier_lstm_forward.1} parent=0 // pred_check
    _
  $region27: #{classifier_lstm_forward.1} parent=0 // pred_check_branch
    %27 = sbr.rel (0) target = $region29
  $region28: #{classifier_lstm_forward.1} parent=0 // pred_region
    _
  $region29: #{classifier_lstm_forward.1} parent=0 // pred_fallthru
    _
  %v28 = vld [vmem:[%s0] sm:$0xff]
  %v29 = vld [vmem:[%s0 + $0x8] sm:$0xff]
  %v30 = vld [vmem:[%s0 + $0x10] sm:$0xff]
  %v31 = vld [vmem:[%s0 + $0x18] sm:$0xff]
  %v32 = vld [vmem:[%s0 + $0x20] sm:$0xff]
  %v33 = vld [vmem:[%s0 + $0x28] sm:$0xff]
  %v34 = vld [vmem:[%s0 + $0x30] sm:$0xff]
  %v35 = vld [vmem:[%s0 + $0x38] sm:$0xff]
  %v36 = vld [vmem:[%s0 + $0x40] sm:$0xff]
  %v37 = vld [vmem:[%s0 + $0x48] sm:$0xff]
  %v38 = vld [vmem:[%s0 + $0x50] sm:$0xff]
  %v39 = vld [vmem:[%s0 + $0x58] sm:$0xff]
  %v40 = vld [vmem:[%s0 + $0x60] sm:$0xff]
  %v41 = vld [vmem:[%s0 + $0x68] sm:$0xff]
  %v42 = vld [vmem:[%s0 + $0x70] sm:$0xff]
  %v43 = vld [vmem:[%s0 + $0x78] sm:$0xff]
  %v44 = vld [vmem:[%s1] sm:$0xff]
  %v45 = vld [vmem:[%s1 + $0x8] sm:$0xff]
  %v46 = vld [vmem:[%s1 + $0x10] sm:$0xff]
  %v47 = vld [vmem:[%s1 + $0x18] sm:$0xff]
  %v48 = vld [vmem:[%s1 + $0x20] sm:$0xff]
  %v49 = vld [vmem:[%s1 + $0x28] sm:$0xff]
  %v50 = vld [vmem:[%s1 + $0x30] sm:$0xff]
  %v51 = vld [vmem:[%s1 + $0x38] sm:$0xff]
  %v52 = vld [vmem:[%s1 + $0x40] sm:$0xff]
  %v53 = vld [vmem:[%s1 + $0x48] sm:$0xff]
  %v54 = vld [vmem:[%s1 + $0x50] sm:$0xff]
  %v55 = vld [vmem:[%s1 + $0x58] sm:$0xff]
  %v56 = vld [vmem:[%s1 + $0x60] sm:$0xff]
  %v57 = vld [vmem:[%s1 + $0x68] sm:$0xff]
  %v58 = vld [vmem:[%s1 + $0x70] sm:$0xff]
  %v59 = vld [vmem:[%s1 + $0x78] sm:$0xff]
  %v60 = vld [vmem:[%s1 + $0x80] sm:$0xff]
  %v61 = vld [vmem:[%s1 + $0x88] sm:$0xff]
  %v62 = vld [vmem:[%s1 + $0x90] sm:$0xff]
  %v63 = vld [vmem:[%s1 + $0x98] sm:$0xff]
  %v64 = vld [vmem:[%s1 + $0xa0] sm:$0xff]
  %v65 = vld [vmem:[%s1 + $0xa8] sm:$0xff]
  %v66 = vld [vmem:[%s1 + $0xb0] sm:$0xff]
  %v67 = vld [vmem:[%s1 + $0xb8] sm:$0xff]
  %v68 = vld [vmem:[%s1 + $0xc0] sm:$0xff]
  %v69 = vld [vmem:[%s1 + $0xc8] sm:$0xff]
  %v70 = vld [vmem:[%s1 + $0xd0] sm:$0xff]
  %v71 = vld [vmem:[%s1 + $0xd8] sm:$0xff]
  %v72 = vld [vmem:[%s1 + $0xe0] sm:$0xff]
  %v73 = vld [vmem:[%s1 + $0xe8] sm:$0xff]
  %v74 = vld [vmem:[%s1 + $0xf0] sm:$0xff]
  %v75 = vld [vmem:[%s1 + $0xf8] sm:$0xff]
  %v76 = vld [vmem:[%s1 + $0x100] sm:$0xff]
  %v77 = vld [vmem:[%s1 + $0x108] sm:$0xff]
  %v78 = vld [vmem:[%s1 + $0x110] sm:$0xff]
  %v79 = vld [vmem:[%s1 + $0x118] sm:$0xff]
  %v80 = vld [vmem:[%s1 + $0x120] sm:$0xff]
  %v81 = vld [vmem:[%s1 + $0x128] sm:$0xff]
  %v82 = vld [vmem:[%s1 + $0x130] sm:$0xff]
  %v83 = vld [vmem:[%s1 + $0x138] sm:$0xff]
  %v84 = vld [vmem:[%s1 + $0x140] sm:$0xff]
  %v85 = vld [vmem:[%s1 + $0x148] sm:$0xff]
  %v86 = vld [vmem:[%s1 + $0x150] sm:$0xff]
  %v87 = vld [vmem:[%s1 + $0x158] sm:$0xff]
  %v88 = vld [vmem:[%s1 + $0x160] sm:$0xff]
  %v89 = vld [vmem:[%s1 + $0x168] sm:$0xff]
  %v90 = vld [vmem:[%s1 + $0x170] sm:$0xff]
  %v91 = vld [vmem:[%s1 + $0x178] sm:$0xff]
  %v92 = vld [vmem:[%s1 + $0x180] sm:$0xff]
  %v93 = vld [vmem:[%s1 + $0x188] sm:$0xff]
  %v94 = vld [vmem:[%s1 + $0x190] sm:$0xff]
  %v95 = vld [vmem:[%s1 + $0x198] sm:$0xff]
  %v96 = vld [vmem:[%s1 + $0x1a0] sm:$0xff]
  %v97 = vld [vmem:[%s1 + $0x1a8] sm:$0xff]
  %v98 = vld [vmem:[%s1 + $0x1b0] sm:$0xff]
  %v99 = vld [vmem:[%s1 + $0x1b8] sm:$0xff]
  %v100 = vld [vmem:[%s1 + $0x1c0] sm:$0xff]
  %v101 = vld [vmem:[%s1 + $0x1c8] sm:$0xff]
  %v102 = vld [vmem:[%s1 + $0x1d0] sm:$0xff]
  %v103 = vld [vmem:[%s1 + $0x1d8] sm:$0xff]
  %v104 = vld [vmem:[%s1 + $0x1e0] sm:$0xff]
  %v105 = vld [vmem:[%s1 + $0x1e8] sm:$0xff]
  %v106 = vld [vmem:[%s1 + $0x1f0] sm:$0xff]
  %v107 = vld [vmem:[%s1 + $0x1f8] sm:$0xff]
  %v108 = vld [vmem:[%s1 + $0x200] sm:$0xff]
  %v109 = vld [vmem:[%s1 + $0x208] sm:$0xff]
  %v110 = vld [vmem:[%s1 + $0x210] sm:$0xff]
  %v111 = vld [vmem:[%s1 + $0x218] sm:$0xff]
  %v112 = vld [vmem:[%s1 + $0x220] sm:$0xff]
  %v113 = vld [vmem:[%s1 + $0x228] sm:$0xff]
  %v114 = vld [vmem:[%s1 + $0x230] sm:$0xff]
  %v115 = vld [vmem:[%s1 + $0x238] sm:$0xff]
  %v116 = vld [vmem:[%s1 + $0x240] sm:$0xff]
  %v117 = vld [vmem:[%s1 + $0x248] sm:$0xff]
  %v118 = vld [vmem:[%s1 + $0x250] sm:$0xff]
  %v119 = vld [vmem:[%s2] sm:$0xff]
  %v120 = vld [vmem:[%s2 + $0x8] sm:$0xff]
  %v121 = vld [vmem:[%s2 + $0x10] sm:$0xff]
  %v122 = vld [vmem:[%s2 + $0x18] sm:$0xff]
  %v123 = vld [vmem:[%s2 + $0x20] sm:$0xff]
  %v124 = vld [vmem:[%s2 + $0x28] sm:$0xff]
  %v125 = vld [vmem:[%s2 + $0x30] sm:$0xff]
  %v126 = vld [vmem:[%s2 + $0x38] sm:$0xff]
  %v127 = vld [vmem:[%s2 + $0x40] sm:$0xff]
  %v128 = vld [vmem:[%s2 + $0x48] sm:$0xff]
  %v129 = vld [vmem:[%s2 + $0x50] sm:$0xff]
  %v130 = vld [vmem:[%s2 + $0x58] sm:$0xff]
  %v131 = vld [vmem:[%s2 + $0x60] sm:$0xff]
  %v132 = vld [vmem:[%s2 + $0x68] sm:$0xff]
  %v133 = vld [vmem:[%s2 + $0x70] sm:$0xff]
  %v134 = vld [vmem:[%s2 + $0x78] sm:$0xff]
  %v135 = vld [vmem:[%s2 + $0x80] sm:$0xff]
  %v136 = vld [vmem:[%s2 + $0x88] sm:$0xff]
  %v137 = vld [vmem:[%s2 + $0x90] sm:$0xff]
  %v138 = vld [vmem:[%s2 + $0x98] sm:$0xff]
  %v139 = vld [vmem:[%s2 + $0xa0] sm:$0xff]
  %v140 = vld [vmem:[%s2 + $0xa8] sm:$0xff]
  %v141 = vld [vmem:[%s2 + $0xb0] sm:$0xff]
  %v142 = vld [vmem:[%s2 + $0xb8] sm:$0xff]
  %v143 = vld [vmem:[%s2 + $0xc0] sm:$0xff]
  %v144 = vld [vmem:[%s2 + $0xc8] sm:$0xff]
  %v145 = vld [vmem:[%s2 + $0xd0] sm:$0xff]
  %v146 = vld [vmem:[%s2 + $0xd8] sm:$0xff]
  %v147 = vld [vmem:[%s2 + $0xe0] sm:$0xff]
  %v148 = vld [vmem:[%s2 + $0xe8] sm:$0xff]
  %v149 = vld [vmem:[%s2 + $0xf0] sm:$0xff]
  %v150 = vld [vmem:[%s2 + $0xf8] sm:$0xff]
  %v151 = vld [vmem:[%s2 + $0x100] sm:$0xff]
  %v152 = vld [vmem:[%s2 + $0x108] sm:$0xff]
  %v153 = vld [vmem:[%s2 + $0x110] sm:$0xff]
  %v154 = vld [vmem:[%s2 + $0x118] sm:$0xff]
  %v155 = vld [vmem:[%s2 + $0x120] sm:$0xff]
  %v156 = vld [vmem:[%s2 + $0x128] sm:$0xff]
  %v157 = vld [vmem:[%s2 + $0x130] sm:$0xff]
  %v158 = vld [vmem:[%s2 + $0x138] sm:$0xff]
  %v159 = vld [vmem:[%s2 + $0x140] sm:$0xff]
  %v160 = vld [vmem:[%s2 + $0x148] sm:$0xff]
  %v161 = vld [vmem:[%s2 + $0x150] sm:$0xff]
  %v162 = vld [vmem:[%s2 + $0x158] sm:$0xff]
  %v163 = vld [vmem:[%s2 + $0x160] sm:$0xff]
  %v164 = vld [vmem:[%s2 + $0x168] sm:$0xff]
  %v165 = vld [vmem:[%s2 + $0x170] sm:$0xff]
  %v166 = vld [vmem:[%s2 + $0x178] sm:$0xff]
  %v167 = vld [vmem:[%s2 + $0x180] sm:$0xff]
  %v168 = vld [vmem:[%s2 + $0x188] sm:$0xff]
  %v169 = vld [vmem:[%s2 + $0x190] sm:$0xff]
  %v170 = vld [vmem:[%s2 + $0x198] sm:$0xff]
  %v171 = vld [vmem:[%s2 + $0x1a0] sm:$0xff]
  %v172 = vld [vmem:[%s2 + $0x1a8] sm:$0xff]
  %v173 = vld [vmem:[%s2 + $0x1b0] sm:$0xff]
  %v174 = vld [vmem:[%s2 + $0x1b8] sm:$0xff]
  %v175 = vld [vmem:[%s2 + $0x1c0] sm:$0xff]
  %v176 = vld [vmem:[%s2 + $0x1c8] sm:$0xff]
  %v177 = vld [vmem:[%s2 + $0x1d0] sm:$0xff]
  %v178 = vld [vmem:[%s2 + $0x1d8] sm:$0xff]
  %v179 = vld [vmem:[%s2 + $0x1e0] sm:$0xff]
  %v180 = vld [vmem:[%s2 + $0x1e8] sm:$0xff]
  %v181 = vld [vmem:[%s2 + $0x1f0] sm:$0xff]
  %v182 = vld [vmem:[%s2 + $0x1f8] sm:$0xff]
  %v183 = vld [vmem:[%s2 + $0x200] sm:$0xff]
  %v184 = vld [vmem:[%s2 + $0x208] sm:$0xff]
  %v185 = vld [vmem:[%s2 + $0x210] sm:$0xff]
  %v186 = vld [vmem:[%s2 + $0x218] sm:$0xff]
  %v187 = vld [vmem:[%s2 + $0x220] sm:$0xff]
  %v188 = vld [vmem:[%s2 + $0x228] sm:$0xff]
  %v189 = vld [vmem:[%s2 + $0x230] sm:$0xff]
  %v190 = vld [vmem:[%s2 + $0x238] sm:$0xff]
  %v191 = vld [vmem:[%s2 + $0x240] sm:$0xff]
  %v192 = vld [vmem:[%s2 + $0x248] sm:$0xff]
  %v193 = vld [vmem:[%s2 + $0x250] sm:$0xff]
  %195 = vset.pattern.permute.xlu0 0
  %196 = vperm.xlu0 %195, %v119
  %v197 = vpop.permute.xlu0 %196
  %200 = vset.pattern.permute.xlu0 0
  %201 = vperm.xlu0 %200, %v120
  %v202 = vpop.permute.xlu0 %201
  %205 = vset.pattern.permute.xlu0 0
  %206 = vperm.xlu0 %205, %v121
  %v207 = vpop.permute.xlu0 %206
  %210 = vset.pattern.permute.xlu0 0
  %211 = vperm.xlu0 %210, %v122
  %v212 = vpop.permute.xlu0 %211
  %215 = vset.pattern.permute.xlu0 0
  %216 = vperm.xlu0 %215, %v123
  %v217 = vpop.permute.xlu0 %216
  %220 = vset.pattern.permute.xlu0 0
  %221 = vperm.xlu0 %220, %v124
  %v222 = vpop.permute.xlu0 %221
  %225 = vset.pattern.permute.xlu0 0
  %226 = vperm.xlu0 %225, %v125
  %v227 = vpop.permute.xlu0 %226
  %230 = vset.pattern.permute.xlu0 0
  %231 = vperm.xlu0 %230, %v126
  %v232 = vpop.permute.xlu0 %231
  %235 = vset.pattern.permute.xlu0 0
  %236 = vperm.xlu0 %235, %v127
  %v237 = vpop.permute.xlu0 %236
  %240 = vset.pattern.permute.xlu0 0
  %241 = vperm.xlu0 %240, %v128
  %v242 = vpop.permute.xlu0 %241
  %245 = vset.pattern.permute.xlu0 0
  %246 = vperm.xlu0 %245, %v129
  %v247 = vpop.permute.xlu0 %246
  %250 = vset.pattern.permute.xlu0 0
  %251 = vperm.xlu0 %250, %v130
  %v252 = vpop.permute.xlu0 %251
  %255 = vset.pattern.permute.xlu0 0
  %256 = vperm.xlu0 %255, %v131
  %v257 = vpop.permute.xlu0 %256
  %260 = vset.pattern.permute.xlu0 0
  %261 = vperm.xlu0 %260, %v132
  %v262 = vpop.permute.xlu0 %261
  %265 = vset.pattern.permute.xlu0 0
  %266 = vperm.xlu0 %265, %v133
  %v267 = vpop.permute.xlu0 %266
  %270 = vset.pattern.permute.xlu0 0
  %271 = vperm.xlu0 %270, %v134
  %v272 = vpop.permute.xlu0 %271
  %275 = vset.pattern.permute.xlu0 0
  %276 = vperm.xlu0 %275, %v135
  %v277 = vpop.permute.xlu0 %276
  %280 = vset.pattern.permute.xlu0 0
  %281 = vperm.xlu0 %280, %v136
  %v282 = vpop.permute.xlu0 %281
  %285 = vset.pattern.permute.xlu0 0
  %286 = vperm.xlu0 %285, %v137
  %v287 = vpop.permute.xlu0 %286
  %290 = vset.pattern.permute.xlu0 0
  %291 = vperm.xlu0 %290, %v138
  %v292 = vpop.permute.xlu0 %291
  %295 = vset.pattern.permute.xlu0 0
  %296 = vperm.xlu0 %295, %v139
  %v297 = vpop.permute.xlu0 %296
  %300 = vset.pattern.permute.xlu0 0
  %301 = vperm.xlu0 %300, %v140
  %v302 = vpop.permute.xlu0 %301
  %305 = vset.pattern.permute.xlu0 0
  %306 = vperm.xlu0 %305, %v141
  %v307 = vpop.permute.xlu0 %306
  %310 = vset.pattern.permute.xlu0 0
  %311 = vperm.xlu0 %310, %v142
  %v312 = vpop.permute.xlu0 %311
  %315 = vset.pattern.permute.xlu0 0
  %316 = vperm.xlu0 %315, %v143
  %v317 = vpop.permute.xlu0 %316
  %320 = vset.pattern.permute.xlu0 0
  %321 = vperm.xlu0 %320, %v144
  %v322 = vpop.permute.xlu0 %321
  %325 = vset.pattern.permute.xlu0 0
  %326 = vperm.xlu0 %325, %v145
  %v327 = vpop.permute.xlu0 %326
  %330 = vset.pattern.permute.xlu0 0
  %331 = vperm.xlu0 %330, %v146
  %v332 = vpop.permute.xlu0 %331
  %335 = vset.pattern.permute.xlu0 0
  %336 = vperm.xlu0 %335, %v147
  %v337 = vpop.permute.xlu0 %336
  %340 = vset.pattern.permute.xlu0 0
  %341 = vperm.xlu0 %340, %v148
  %v342 = vpop.permute.xlu0 %341
  %345 = vset.pattern.permute.xlu0 0
  %346 = vperm.xlu0 %345, %v149
  %v347 = vpop.permute.xlu0 %346
  %350 = vset.pattern.permute.xlu0 0
  %351 = vperm.xlu0 %350, %v150
  %v352 = vpop.permute.xlu0 %351
  %355 = vset.pattern.permute.xlu0 0
  %356 = vperm.xlu0 %355, %v151
  %v357 = vpop.permute.xlu0 %356
  %360 = vset.pattern.permute.xlu0 0
  %361 = vperm.xlu0 %360, %v152
  %v362 = vpop.permute.xlu0 %361
  %365 = vset.pattern.permute.xlu0 0
  %366 = vperm.xlu0 %365, %v153
  %v367 = vpop.permute.xlu0 %366
  %370 = vset.pattern.permute.xlu0 0
  %371 = vperm.xlu0 %370, %v154
  %v372 = vpop.permute.xlu0 %371
  %375 = vset.pattern.permute.xlu0 0
  %376 = vperm.xlu0 %375, %v155
  %v377 = vpop.permute.xlu0 %376
  %380 = vset.pattern.permute.xlu0 0
  %381 = vperm.xlu0 %380, %v156
  %v382 = vpop.permute.xlu0 %381
  %385 = vset.pattern.permute.xlu0 0
  %386 = vperm.xlu0 %385, %v157
  %v387 = vpop.permute.xlu0 %386
  %390 = vset.pattern.permute.xlu0 0
  %391 = vperm.xlu0 %390, %v158
  %v392 = vpop.permute.xlu0 %391
  %395 = vset.pattern.permute.xlu0 0
  %396 = vperm.xlu0 %395, %v159
  %v397 = vpop.permute.xlu0 %396
  %400 = vset.pattern.permute.xlu0 0
  %401 = vperm.xlu0 %400, %v160
  %v402 = vpop.permute.xlu0 %401
  %405 = vset.pattern.permute.xlu0 0
  %406 = vperm.xlu0 %405, %v161
  %v407 = vpop.permute.xlu0 %406
  %410 = vset.pattern.permute.xlu0 0
  %411 = vperm.xlu0 %410, %v162
  %v412 = vpop.permute.xlu0 %411
  %415 = vset.pattern.permute.xlu0 0
  %416 = vperm.xlu0 %415, %v163
  %v417 = vpop.permute.xlu0 %416
  %420 = vset.pattern.permute.xlu0 0
  %421 = vperm.xlu0 %420, %v164
  %v422 = vpop.permute.xlu0 %421
  %425 = vset.pattern.permute.xlu0 0
  %426 = vperm.xlu0 %425, %v165
  %v427 = vpop.permute.xlu0 %426
  %430 = vset.pattern.permute.xlu0 0
  %431 = vperm.xlu0 %430, %v166
  %v432 = vpop.permute.xlu0 %431
  %435 = vset.pattern.permute.xlu0 0
  %436 = vperm.xlu0 %435, %v167
  %v437 = vpop.permute.xlu0 %436
  %440 = vset.pattern.permute.xlu0 0
  %441 = vperm.xlu0 %440, %v168
  %v442 = vpop.permute.xlu0 %441
  %445 = vset.pattern.permute.xlu0 0
  %446 = vperm.xlu0 %445, %v169
  %v447 = vpop.permute.xlu0 %446
  %450 = vset.pattern.permute.xlu0 0
  %451 = vperm.xlu0 %450, %v170
  %v452 = vpop.permute.xlu0 %451
  %455 = vset.pattern.permute.xlu0 0
  %456 = vperm.xlu0 %455, %v171
  %v457 = vpop.permute.xlu0 %456
  %460 = vset.pattern.permute.xlu0 0
  %461 = vperm.xlu0 %460, %v172
  %v462 = vpop.permute.xlu0 %461
  %465 = vset.pattern.permute.xlu0 0
  %466 = vperm.xlu0 %465, %v173
  %v467 = vpop.permute.xlu0 %466
  %470 = vset.pattern.permute.xlu0 0
  %471 = vperm.xlu0 %470, %v174
  %v472 = vpop.permute.xlu0 %471
  %475 = vset.pattern.permute.xlu0 0
  %476 = vperm.xlu0 %475, %v175
  %v477 = vpop.permute.xlu0 %476
  %480 = vset.pattern.permute.xlu0 0
  %481 = vperm.xlu0 %480, %v176
  %v482 = vpop.permute.xlu0 %481
  %485 = vset.pattern.permute.xlu0 0
  %486 = vperm.xlu0 %485, %v177
  %v487 = vpop.permute.xlu0 %486
  %490 = vset.pattern.permute.xlu0 0
  %491 = vperm.xlu0 %490, %v178
  %v492 = vpop.permute.xlu0 %491
  %495 = vset.pattern.permute.xlu0 0
  %496 = vperm.xlu0 %495, %v179
  %v497 = vpop.permute.xlu0 %496
  %500 = vset.pattern.permute.xlu0 0
  %501 = vperm.xlu0 %500, %v180
  %v502 = vpop.permute.xlu0 %501
  %505 = vset.pattern.permute.xlu0 0
  %506 = vperm.xlu0 %505, %v181
  %v507 = vpop.permute.xlu0 %506
  %510 = vset.pattern.permute.xlu0 0
  %511 = vperm.xlu0 %510, %v182
  %v512 = vpop.permute.xlu0 %511
  %515 = vset.pattern.permute.xlu0 0
  %516 = vperm.xlu0 %515, %v183
  %v517 = vpop.permute.xlu0 %516
  %520 = vset.pattern.permute.xlu0 0
  %521 = vperm.xlu0 %520, %v184
  %v522 = vpop.permute.xlu0 %521
  %525 = vset.pattern.permute.xlu0 0
  %526 = vperm.xlu0 %525, %v185
  %v527 = vpop.permute.xlu0 %526
  %530 = vset.pattern.permute.xlu0 0
  %531 = vperm.xlu0 %530, %v186
  %v532 = vpop.permute.xlu0 %531
  %535 = vset.pattern.permute.xlu0 0
  %536 = vperm.xlu0 %535, %v187
  %v537 = vpop.permute.xlu0 %536
  %540 = vset.pattern.permute.xlu0 0
  %541 = vperm.xlu0 %540, %v188
  %v542 = vpop.permute.xlu0 %541
  %545 = vset.pattern.permute.xlu0 0
  %546 = vperm.xlu0 %545, %v189
  %v547 = vpop.permute.xlu0 %546
  %550 = vset.pattern.permute.xlu0 0
  %551 = vperm.xlu0 %550, %v190
  %v552 = vpop.permute.xlu0 %551
  %555 = vset.pattern.permute.xlu0 0
  %556 = vperm.xlu0 %555, %v191
  %v557 = vpop.permute.xlu0 %556
  %560 = vset.pattern.permute.xlu0 0
  %561 = vperm.xlu0 %560, %v192
  %v562 = vpop.permute.xlu0 %561
  %565 = vset.pattern.permute.xlu0 0
  %566 = vperm.xlu0 %565, %v193
  %v567 = vpop.permute.xlu0 %566
  %vm569 = vcmask 261120
  %v571 = vsel %vm569, %v44, 0
  %v574 = vsel %vm569, %v45, 0
  %v577 = vsel %vm569, %v46, 0
  %v580 = vsel %vm569, %v47, 0
  %v583 = vsel %vm569, %v48, 0
  %v586 = vsel %vm569, %v49, 0
  %v589 = vsel %vm569, %v50, 0
  %v592 = vsel %vm569, %v51, 0
  %v595 = vsel %vm569, %v52, 0
  %v598 = vsel %vm569, %v53, 0
  %v601 = vsel %vm569, %v54, 0
  %v604 = vsel %vm569, %v55, 0
  %v607 = vsel %vm569, %v56, 0
  %v610 = vsel %vm569, %v57, 0
  %v613 = vsel %vm569, %v58, 0
  %v616 = vsel %vm569, %v59, 0
  %v619 = vsel %vm569, %v60, 0
  %v622 = vsel %vm569, %v61, 0
  %v625 = vsel %vm569, %v62, 0
  %v628 = vsel %vm569, %v63, 0
  %v631 = vsel %vm569, %v64, 0
  %v634 = vsel %vm569, %v65, 0
  %v637 = vsel %vm569, %v66, 0
  %v640 = vsel %vm569, %v67, 0
  %v643 = vsel %vm569, %v68, 0
  %v646 = vsel %vm569, %v69, 0
  %v649 = vsel %vm569, %v70, 0
  %v652 = vsel %vm569, %v71, 0
  %v655 = vsel %vm569, %v72, 0
  %v658 = vsel %vm569, %v73, 0
  %v661 = vsel %vm569, %v74, 0
  %v664 = vsel %vm569, %v75, 0
  %v667 = vsel %vm569, %v76, 0
  %v670 = vsel %vm569, %v77, 0
  %v673 = vsel %vm569, %v78, 0
  %v676 = vsel %vm569, %v79, 0
  %v679 = vsel %vm569, %v80, 0
  %v682 = vsel %vm569, %v81, 0
  %v685 = vsel %vm569, %v82, 0
  %v688 = vsel %vm569, %v83, 0
  %v691 = vsel %vm569, %v84, 0
  %v694 = vsel %vm569, %v85, 0
  %v697 = vsel %vm569, %v86, 0
  %v700 = vsel %vm569, %v87, 0
  %v703 = vsel %vm569, %v88, 0
  %v706 = vsel %vm569, %v89, 0
  %v709 = vsel %vm569, %v90, 0
  %v712 = vsel %vm569, %v91, 0
  %v715 = vsel %vm569, %v92, 0
  %v718 = vsel %vm569, %v93, 0
  %v721 = vsel %vm569, %v94, 0
  %v724 = vsel %vm569, %v95, 0
  %v727 = vsel %vm569, %v96, 0
  %v730 = vsel %vm569, %v97, 0
  %v733 = vsel %vm569, %v98, 0
  %v736 = vsel %vm569, %v99, 0
  %v739 = vsel %vm569, %v100, 0
  %v742 = vsel %vm569, %v101, 0
  %v745 = vsel %vm569, %v102, 0
  %v748 = vsel %vm569, %v103, 0
  %v751 = vsel %vm569, %v104, 0
  %v754 = vsel %vm569, %v105, 0
  %v757 = vsel %vm569, %v106, 0
  %v760 = vsel %vm569, %v107, 0
  %v763 = vsel %vm569, %v108, 0
  %v766 = vsel %vm569, %v109, 0
  %v769 = vsel %vm569, %v110, 0
  %v772 = vsel %vm569, %v111, 0
  %v775 = vsel %vm569, %v112, 0
  %v778 = vsel %vm569, %v113, 0
  %v781 = vsel %vm569, %v114, 0
  %v784 = vsel %vm569, %v115, 0
  %v787 = vsel %vm569, %v116, 0
  %v790 = vsel %vm569, %v117, 0
  %v793 = vsel %vm569, %v118, 0
  %v796 = vsel %vm569, %v28, 0
  %v799 = vsel %vm569, %v29, 0
  %v802 = vsel %vm569, %v30, 0
  %v805 = vsel %vm569, %v31, 0
  %v808 = vsel %vm569, %v32, 0
  %v811 = vsel %vm569, %v33, 0
  %v814 = vsel %vm569, %v34, 0
  %v817 = vsel %vm569, %v35, 0
  %v820 = vsel %vm569, %v36, 0
  %v823 = vsel %vm569, %v37, 0
  %v826 = vsel %vm569, %v38, 0
  %v829 = vsel %vm569, %v39, 0
  %v832 = vsel %vm569, %v40, 0
  %v835 = vsel %vm569, %v41, 0
  %v838 = vsel %vm569, %v42, 0
  %v841 = vsel %vm569, %v43, 0
  %843 = vmatprep.subr.mxu0 0.0
  %844 = vmatpush1.xpose.msra.mxu0 %v796
  %845 = vmatprep.subr.mxu0 0.0
  %846 = vmatpush1.xpose.msra.mxu0 %v799
  %847 = vmatprep.subr.mxu0 0.0
  %848 = vmatpush1.xpose.msra.mxu0 %v802
  %849 = vmatprep.subr.mxu0 0.0
  %850 = vmatpush1.xpose.msra.mxu0 %v805
  %851 = vmatprep.subr.mxu0 0.0
  %852 = vmatpush1.xpose.msra.mxu0 %v808
  %853 = vmatprep.subr.mxu0 0.0
  %854 = vmatpush1.xpose.msra.mxu0 %v811
  %855 = vmatprep.subr.mxu0 0.0
  %856 = vmatpush1.xpose.msra.mxu0 %v814
  %857 = vmatprep.subr.mxu0 0.0
  %858 = vmatpush1.xpose.msra.mxu0 %v817
  %859 = vmatprep.subr.mxu0 0.0
  %860 = vmatpush1.xpose.msra.mxu0 %v820
  %861 = vmatprep.subr.mxu0 0.0
  %862 = vmatpush1.xpose.msra.mxu0 %v823
  %863 = vmatprep.subr.mxu0 0.0
  %864 = vmatpush1.xpose.msra.mxu0 %v826
  %865 = vmatprep.subr.mxu0 0.0
  %866 = vmatpush1.xpose.msra.mxu0 %v829
  %867 = vmatprep.subr.mxu0 0.0
  %868 = vmatpush1.xpose.msra.mxu0 %v832
  %869 = vmatprep.subr.mxu0 0.0
  %870 = vmatpush1.xpose.msra.mxu0 %v835
  %871 = vmatprep.subr.mxu0 0.0
  %872 = vmatpush1.xpose.msra.mxu0 %v838
  %873 = vmatprep.subr.mxu0 0.0
  %874 = vmatpush1.xpose.msra.mxu0 %v841
  %875 = vmatprep.subr.mxu0 0.0
  %876 = vmatpush1.xpose.msra.mxu0 0.0
  %877 = vmatprep.subr.mxu0 0.0
  %878 = vmatpush1.xpose.msra.mxu0 0.0
  %879 = vmatprep.subr.mxu0 0.0
  %880 = vmatpush1.xpose.msra.mxu0 0.0
  %881 = vmatprep.subr.mxu0 0.0
  %882 = vmatpush1.xpose.msra.mxu0 0.0
  %883 = vmatprep.subr.mxu0 0.0
  %884 = vmatpush1.xpose.msra.mxu0 0.0
  %885 = vmatprep.subr.mxu0 0.0
  %886 = vmatpush1.xpose.msra.mxu0 0.0
  %887 = vmatprep.subr.mxu0 0.0
  %888 = vmatpush1.xpose.msra.mxu0 0.0
  %889 = vmatprep.subr.mxu0 0.0
  %890 = vmatpush1.xpose.msra.mxu0 0.0
  %891 = vmatprep.subr.mxu0 0.0
  %892 = vmatpush1.xpose.msra.mxu0 0.0
  %893 = vmatprep.subr.mxu0 0.0
  %894 = vmatpush1.xpose.msra.mxu0 0.0
  %895 = vmatprep.subr.mxu0 0.0
  %896 = vmatpush1.xpose.msra.mxu0 0.0
  %897 = vmatprep.subr.mxu0 0.0
  %898 = vmatpush1.xpose.msra.mxu0 0.0
  %899 = vmatprep.subr.mxu0 0.0
  %900 = vmatpush1.xpose.msra.mxu0 0.0
  %901 = vmatprep.subr.mxu0 0.0
  %902 = vmatpush1.xpose.msra.mxu0 0.0
  %903 = vmatprep.subr.mxu0 0.0
  %904 = vmatpush1.xpose.msra.mxu0 0.0
  %905 = vmatprep.subr.mxu0 0.0
  %906 = vmatpush1.xpose.msra.mxu0 0.0
  %907 = vmatprep.mubr.f32.mxu0 0.0
  %908 = vmatmul.mubr.f32.gmra.mrb[0].mxu0 %v571
  %v909 = vpop.f32.mrb[0].mxu0
  %v910 = vadd.f32 %v197, %v909
  %v911 = vpop.f32.mrb[0].mxu0
  %912 = vmatprep.mubr.f32.mxu0 0.0
  %913 = vmatmul.mubr.f32.gmra.mrb[0].mxu0 %v574
  %v914 = vpop.f32.mrb[0].mxu0
  %v915 = vadd.f32 %v202, %v914
  %v916 = vpop.f32.mrb[0].mxu0
  %917 = vmatprep.mubr.f32.mxu0 0.0
  %918 = vmatmul.mubr.f32.gmra.mrb[0].mxu0 %v577
  %v919 = vpop.f32.mrb[0].mxu0
  %v920 = vadd.f32 %v207, %v919
  %v921 = vpop.f32.mrb[0].mxu0
  %922 = vmatprep.mubr.f32.mxu0 0.0
  %923 = vmatmul.mubr.f32.gmra.mrb[0].mxu0 %v580
  %v924 = vpop.f32.mrb[0].mxu0
  %v925 = vadd.f32 %v212, %v924
  %v926 = vpop.f32.mrb[0].mxu0
  %927 = vmatprep.mubr.f32.mxu0 0.0
  %928 = vmatmul.mubr.f32.gmra.mrb[0].mxu0 %v583
  %v929 = vpop.f32.mrb[0].mxu0
  %v930 = vadd.f32 %v217, %v929
  %v931 = vpop.f32.mrb[0].mxu0
  %932 = vmatprep.mubr.f32.mxu0 0.0
  %933 = vmatmul.mubr.f32.gmra.mrb[0].mxu0 %v586
  %v934 = vpop.f32.mrb[0].mxu0
  %v935 = vadd.f32 %v222, %v934
  %v936 = vpop.f32.mrb[0].mxu0
  %937 = vmatprep.mubr.f32.mxu0 0.0
  %938 = vmatmul.mubr.f32.gmra.mrb[0].mxu0 %v589
  %v939 = vpop.f32.mrb[0].mxu0
  %v940 = vadd.f32 %v227, %v939
  %v941 = vpop.f32.mrb[0].mxu0
  %942 = vmatprep.mubr.f32.mxu0 0.0
  %943 = vmatmul.mubr.f32.gmra.mrb[0].mxu0 %v592
  %v944 = vpop.f32.mrb[0].mxu0
  %v945 = vadd.f32 %v232, %v944
  %v946 = vpop.f32.mrb[0].mxu0
  %947 = vmatprep.mubr.f32.mxu0 0.0
  %948 = vmatmul.mubr.f32.gmra.mrb[0].mxu0 %v595
  %v949 = vpop.f32.mrb[0].mxu0
  %v950 = vadd.f32 %v237, %v949
  %v951 = vpop.f32.mrb[0].mxu0
  %952 = vmatprep.mubr.f32.mxu0 0.0
  %953 = vmatmul.mubr.f32.gmra.mrb[0].mxu0 %v598
  %v954 = vpop.f32.mrb[0].mxu0
  %v955 = vadd.f32 %v242, %v954
  %v956 = vpop.f32.mrb[0].mxu0
  %957 = vmatprep.mubr.f32.mxu0 0.0
  %958 = vmatmul.mubr.f32.gmra.mrb[0].mxu0 %v601
  %v959 = vpop.f32.mrb[0].mxu0
  %v960 = vadd.f32 %v247, %v959
  %v961 = vpop.f32.mrb[0].mxu0
  %962 = vmatprep.mubr.f32.mxu0 0.0
  %963 = vmatmul.mubr.f32.gmra.mrb[0].mxu0 %v604
  %v964 = vpop.f32.mrb[0].mxu0
  %v965 = vadd.f32 %v252, %v964
  %v966 = vpop.f32.mrb[0].mxu0
  %967 = vmatprep.mubr.f32.mxu0 0.0
  %968 = vmatmul.mubr.f32.gmra.mrb[0].mxu0 %v607
  %v969 = vpop.f32.mrb[0].mxu0
  %v970 = vadd.f32 %v257, %v969
  %v971 = vpop.f32.mrb[0].mxu0
  %972 = vmatprep.mubr.f32.mxu0 0.0
  %973 = vmatmul.mubr.f32.gmra.mrb[0].mxu0 %v610
  %v974 = vpop.f32.mrb[0].mxu0
  %v975 = vadd.f32 %v262, %v974
  %v976 = vpop.f32.mrb[0].mxu0
  %977 = vmatprep.mubr.f32.mxu0 0.0
  %978 = vmatmul.mubr.f32.gmra.mrb[0].mxu0 %v613
  %v979 = vpop.f32.mrb[0].mxu0
  %v980 = vadd.f32 %v267, %v979
  %v981 = vpop.f32.mrb[0].mxu0
  %982 = vmatprep.mubr.f32.mxu0 0.0
  %983 = vmatmul.mubr.f32.gmra.mrb[0].mxu0 %v616
  %v984 = vpop.f32.mrb[0].mxu0
  %v985 = vadd.f32 %v272, %v984
  %v986 = vpop.f32.mrb[0].mxu0
  %987 = vmatprep.mubr.f32.mxu0 0.0
  %988 = vmatmul.mubr.f32.gmra.mrb[0].mxu0 %v619
  %v989 = vpop.f32.mrb[0].mxu0
  %v990 = vadd.f32 %v277, %v989
  %v991 = vpop.f32.mrb[0].mxu0
  %992 = vmatprep.mubr.f32.mxu0 0.0
  %993 = vmatmul.mubr.f32.gmra.mrb[0].mxu0 %v622
  %v994 = vpop.f32.mrb[0].mxu0
  %v995 = vadd.f32 %v282, %v994
  %v996 = vpop.f32.mrb[0].mxu0
  %997 = vmatprep.mubr.f32.mxu0 0.0
  %998 = vmatmul.mubr.f32.gmra.mrb[0].mxu0 %v625
  %v999 = vpop.f32.mrb[0].mxu0
  %v1000 = vadd.f32 %v287, %v999
  %v1001 = vpop.f32.mrb[0].mxu0
  %1002 = vmatprep.mubr.f32.mxu0 0.0
  %1003 = vmatmul.mubr.f32.gmra.mrb[0].mxu0 %v628
  %v1004 = vpop.f32.mrb[0].mxu0
  %v1005 = vadd.f32 %v292, %v1004
  %v1006 = vpop.f32.mrb[0].mxu0
  %1007 = vmatprep.mubr.f32.mxu0 0.0
  %1008 = vmatmul.mubr.f32.gmra.mrb[0].mxu0 %v631
  %v1009 = vpop.f32.mrb[0].mxu0
  %v1010 = vadd.f32 %v297, %v1009
  %v1011 = vpop.f32.mrb[0].mxu0
  %1012 = vmatprep.mubr.f32.mxu0 0.0
  %1013 = vmatmul.mubr.f32.gmra.mrb[0].mxu0 %v634
  %v1014 = vpop.f32.mrb[0].mxu0
  %v1015 = vadd.f32 %v302, %v1014
  %v1016 = vpop.f32.mrb[0].mxu0
  %1017 = vmatprep.mubr.f32.mxu0 0.0
  %1018 = vmatmul.mubr.f32.gmra.mrb[0].mxu0 %v637
  %v1019 = vpop.f32.mrb[0].mxu0
  %v1020 = vadd.f32 %v307, %v1019
  %v1021 = vpop.f32.mrb[0].mxu0
  %1022 = vmatprep.mubr.f32.mxu0 0.0
  %1023 = vmatmul.mubr.f32.gmra.mrb[0].mxu0 %v640
  %v1024 = vpop.f32.mrb[0].mxu0
  %v1025 = vadd.f32 %v312, %v1024
  %v1026 = vpop.f32.mrb[0].mxu0
  %1027 = vmatprep.mubr.f32.mxu0 0.0
  %1028 = vmatmul.mubr.f32.gmra.mrb[0].mxu0 %v643
  %v1029 = vpop.f32.mrb[0].mxu0
  %v1030 = vadd.f32 %v317, %v1029
  %v1031 = vpop.f32.mrb[0].mxu0
  %1032 = vmatprep.mubr.f32.mxu0 0.0
  %1033 = vmatmul.mubr.f32.gmra.mrb[0].mxu0 %v646
  %v1034 = vpop.f32.mrb[0].mxu0
  %v1035 = vadd.f32 %v322, %v1034
  %v1036 = vpop.f32.mrb[0].mxu0
  %1037 = vmatprep.mubr.f32.mxu0 0.0
  %1038 = vmatmul.mubr.f32.gmra.mrb[0].mxu0 %v649
  %v1039 = vpop.f32.mrb[0].mxu0
  %v1040 = vadd.f32 %v327, %v1039
  %v1041 = vpop.f32.mrb[0].mxu0
  %1042 = vmatprep.mubr.f32.mxu0 0.0
  %1043 = vmatmul.mubr.f32.gmra.mrb[0].mxu0 %v652
  %v1044 = vpop.f32.mrb[0].mxu0
  %v1045 = vadd.f32 %v332, %v1044
  %v1046 = vpop.f32.mrb[0].mxu0
  %1047 = vmatprep.mubr.f32.mxu0 0.0
  %1048 = vmatmul.mubr.f32.gmra.mrb[0].mxu0 %v655
  %v1049 = vpop.f32.mrb[0].mxu0
  %v1050 = vadd.f32 %v337, %v1049
  %v1051 = vpop.f32.mrb[0].mxu0
  %1052 = vmatprep.mubr.f32.mxu0 0.0
  %1053 = vmatmul.mubr.f32.gmra.mrb[0].mxu0 %v658
  %v1054 = vpop.f32.mrb[0].mxu0
  %v1055 = vadd.f32 %v342, %v1054
  %v1056 = vpop.f32.mrb[0].mxu0
  %1057 = vmatprep.mubr.f32.mxu0 0.0
  %1058 = vmatmul.mubr.f32.gmra.mrb[0].mxu0 %v661
  %v1059 = vpop.f32.mrb[0].mxu0
  %v1060 = vadd.f32 %v347, %v1059
  %v1061 = vpop.f32.mrb[0].mxu0
  %1062 = vmatprep.mubr.f32.mxu0 0.0
  %1063 = vmatmul.mubr.f32.gmra.mrb[0].mxu0 %v664
  %v1064 = vpop.f32.mrb[0].mxu0
  %v1065 = vadd.f32 %v352, %v1064
  %v1066 = vpop.f32.mrb[0].mxu0
  %1067 = vmatprep.mubr.f32.mxu0 0.0
  %1068 = vmatmul.mubr.f32.gmra.mrb[0].mxu0 %v667
  %v1069 = vpop.f32.mrb[0].mxu0
  %v1070 = vadd.f32 %v357, %v1069
  %v1071 = vpop.f32.mrb[0].mxu0
  %1072 = vmatprep.mubr.f32.mxu0 0.0
  %1073 = vmatmul.mubr.f32.gmra.mrb[0].mxu0 %v670
  %v1074 = vpop.f32.mrb[0].mxu0
  %v1075 = vadd.f32 %v362, %v1074
  %v1076 = vpop.f32.mrb[0].mxu0
  %1077 = vmatprep.mubr.f32.mxu0 0.0
  %1078 = vmatmul.mubr.f32.gmra.mrb[0].mxu0 %v673
  %v1079 = vpop.f32.mrb[0].mxu0
  %v1080 = vadd.f32 %v367, %v1079
  %v1081 = vpop.f32.mrb[0].mxu0
  %1082 = vmatprep.mubr.f32.mxu0 0.0
  %1083 = vmatmul.mubr.f32.gmra.mrb[0].mxu0 %v676
  %v1084 = vpop.f32.mrb[0].mxu0
  %v1085 = vadd.f32 %v372, %v1084
  %v1086 = vpop.f32.mrb[0].mxu0
  %1087 = vmatprep.mubr.f32.mxu0 0.0
  %1088 = vmatmul.mubr.f32.gmra.mrb[0].mxu0 %v679
  %v1089 = vpop.f32.mrb[0].mxu0
  %v1090 = vadd.f32 %v377, %v1089
  %v1091 = vpop.f32.mrb[0].mxu0
  %1092 = vmatprep.mubr.f32.mxu0 0.0
  %1093 = vmatmul.mubr.f32.gmra.mrb[0].mxu0 %v682
  %v1094 = vpop.f32.mrb[0].mxu0
  %v1095 = vadd.f32 %v382, %v1094
  %v1096 = vpop.f32.mrb[0].mxu0
  %1097 = vmatprep.mubr.f32.mxu0 0.0
  %1098 = vmatmul.mubr.f32.gmra.mrb[0].mxu0 %v685
  %v1099 = vpop.f32.mrb[0].mxu0
  %v1100 = vadd.f32 %v387, %v1099
  %v1101 = vpop.f32.mrb[0].mxu0
  %1102 = vmatprep.mubr.f32.mxu0 0.0
  %1103 = vmatmul.mubr.f32.gmra.mrb[0].mxu0 %v688
  %v1104 = vpop.f32.mrb[0].mxu0
  %v1105 = vadd.f32 %v392, %v1104
  %v1106 = vpop.f32.mrb[0].mxu0
  %1107 = vmatprep.mubr.f32.mxu0 0.0
  %1108 = vmatmul.mubr.f32.gmra.mrb[0].mxu0 %v691
  %v1109 = vpop.f32.mrb[0].mxu0
  %v1110 = vadd.f32 %v397, %v1109
  %v1111 = vpop.f32.mrb[0].mxu0
  %1112 = vmatprep.mubr.f32.mxu0 0.0
  %1113 = vmatmul.mubr.f32.gmra.mrb[0].mxu0 %v694
  %v1114 = vpop.f32.mrb[0].mxu0
  %v1115 = vadd.f32 %v402, %v1114
  %v1116 = vpop.f32.mrb[0].mxu0
  %1117 = vmatprep.mubr.f32.mxu0 0.0
  %1118 = vmatmul.mubr.f32.gmra.mrb[0].mxu0 %v697
  %v1119 = vpop.f32.mrb[0].mxu0
  %v1120 = vadd.f32 %v407, %v1119
  %v1121 = vpop.f32.mrb[0].mxu0
  %1122 = vmatprep.mubr.f32.mxu0 0.0
  %1123 = vmatmul.mubr.f32.gmra.mrb[0].mxu0 %v700
  %v1124 = vpop.f32.mrb[0].mxu0
  %v1125 = vadd.f32 %v412, %v1124
  %v1126 = vpop.f32.mrb[0].mxu0
  %1127 = vmatprep.mubr.f32.mxu0 0.0
  %1128 = vmatmul.mubr.f32.gmra.mrb[0].mxu0 %v703
  %v1129 = vpop.f32.mrb[0].mxu0
  %v1130 = vadd.f32 %v417, %v1129
  %v1131 = vpop.f32.mrb[0].mxu0
  %1132 = vmatprep.mubr.f32.mxu0 0.0
  %1133 = vmatmul.mubr.f32.gmra.mrb[0].mxu0 %v706
  %v1134 = vpop.f32.mrb[0].mxu0
  %v1135 = vadd.f32 %v422, %v1134
  %v1136 = vpop.f32.mrb[0].mxu0
  %1137 = vmatprep.mubr.f32.mxu0 0.0
  %1138 = vmatmul.mubr.f32.gmra.mrb[0].mxu0 %v709
  %v1139 = vpop.f32.mrb[0].mxu0
  %v1140 = vadd.f32 %v427, %v1139
  %v1141 = vpop.f32.mrb[0].mxu0
  %1142 = vmatprep.mubr.f32.mxu0 0.0
  %1143 = vmatmul.mubr.f32.gmra.mrb[0].mxu0 %v712
  %v1144 = vpop.f32.mrb[0].mxu0
  %v1145 = vadd.f32 %v432, %v1144
  %v1146 = vpop.f32.mrb[0].mxu0
  %1147 = vmatprep.mubr.f32.mxu0 0.0
  %1148 = vmatmul.mubr.f32.gmra.mrb[0].mxu0 %v715
  %v1149 = vpop.f32.mrb[0].mxu0
  %v1150 = vadd.f32 %v437, %v1149
  %v1151 = vpop.f32.mrb[0].mxu0
  %1152 = vmatprep.mubr.f32.mxu0 0.0
  %1153 = vmatmul.mubr.f32.gmra.mrb[0].mxu0 %v718
  %v1154 = vpop.f32.mrb[0].mxu0
  %v1155 = vadd.f32 %v442, %v1154
  %v1156 = vpop.f32.mrb[0].mxu0
  %1157 = vmatprep.mubr.f32.mxu0 0.0
  %1158 = vmatmul.mubr.f32.gmra.mrb[0].mxu0 %v721
  %v1159 = vpop.f32.mrb[0].mxu0
  %v1160 = vadd.f32 %v447, %v1159
  %v1161 = vpop.f32.mrb[0].mxu0
  %1162 = vmatprep.mubr.f32.mxu0 0.0
  %1163 = vmatmul.mubr.f32.gmra.mrb[0].mxu0 %v724
  %v1164 = vpop.f32.mrb[0].mxu0
  %v1165 = vadd.f32 %v452, %v1164
  %v1166 = vpop.f32.mrb[0].mxu0
  %1167 = vmatprep.mubr.f32.mxu0 0.0
  %1168 = vmatmul.mubr.f32.gmra.mrb[0].mxu0 %v727
  %v1169 = vpop.f32.mrb[0].mxu0
  %v1170 = vadd.f32 %v457, %v1169
  %v1171 = vpop.f32.mrb[0].mxu0
  %1172 = vmatprep.mubr.f32.mxu0 0.0
  %1173 = vmatmul.mubr.f32.gmra.mrb[0].mxu0 %v730
  %v1174 = vpop.f32.mrb[0].mxu0
  %v1175 = vadd.f32 %v462, %v1174
  %v1176 = vpop.f32.mrb[0].mxu0
  %1177 = vmatprep.mubr.f32.mxu0 0.0
  %1178 = vmatmul.mubr.f32.gmra.mrb[0].mxu0 %v733
  %v1179 = vpop.f32.mrb[0].mxu0
  %v1180 = vadd.f32 %v467, %v1179
  %v1181 = vpop.f32.mrb[0].mxu0
  %1182 = vmatprep.mubr.f32.mxu0 0.0
  %1183 = vmatmul.mubr.f32.gmra.mrb[0].mxu0 %v736
  %v1184 = vpop.f32.mrb[0].mxu0
  %v1185 = vadd.f32 %v472, %v1184
  %v1186 = vpop.f32.mrb[0].mxu0
  %1187 = vmatprep.mubr.f32.mxu0 0.0
  %1188 = vmatmul.mubr.f32.gmra.mrb[0].mxu0 %v739
  %v1189 = vpop.f32.mrb[0].mxu0
  %v1190 = vadd.f32 %v477, %v1189
  %v1191 = vpop.f32.mrb[0].mxu0
  %1192 = vmatprep.mubr.f32.mxu0 0.0
  %1193 = vmatmul.mubr.f32.gmra.mrb[0].mxu0 %v742
  %v1194 = vpop.f32.mrb[0].mxu0
  %v1195 = vadd.f32 %v482, %v1194
  %v1196 = vpop.f32.mrb[0].mxu0
  %1197 = vmatprep.mubr.f32.mxu0 0.0
  %1198 = vmatmul.mubr.f32.gmra.mrb[0].mxu0 %v745
  %v1199 = vpop.f32.mrb[0].mxu0
  %v1200 = vadd.f32 %v487, %v1199
  %v1201 = vpop.f32.mrb[0].mxu0
  %1202 = vmatprep.mubr.f32.mxu0 0.0
  %1203 = vmatmul.mubr.f32.gmra.mrb[0].mxu0 %v748
  %v1204 = vpop.f32.mrb[0].mxu0
  %v1205 = vadd.f32 %v492, %v1204
  %v1206 = vpop.f32.mrb[0].mxu0
  %1207 = vmatprep.mubr.f32.mxu0 0.0
  %1208 = vmatmul.mubr.f32.gmra.mrb[0].mxu0 %v751
  %v1209 = vpop.f32.mrb[0].mxu0
  %v1210 = vadd.f32 %v497, %v1209
  %v1211 = vpop.f32.mrb[0].mxu0
  %1212 = vmatprep.mubr.f32.mxu0 0.0
  %1213 = vmatmul.mubr.f32.gmra.mrb[0].mxu0 %v754
  %v1214 = vpop.f32.mrb[0].mxu0
  %v1215 = vadd.f32 %v502, %v1214
  %v1216 = vpop.f32.mrb[0].mxu0
  %1217 = vmatprep.mubr.f32.mxu0 0.0
  %1218 = vmatmul.mubr.f32.gmra.mrb[0].mxu0 %v757
  %v1219 = vpop.f32.mrb[0].mxu0
  %v1220 = vadd.f32 %v507, %v1219
  %v1221 = vpop.f32.mrb[0].mxu0
  %1222 = vmatprep.mubr.f32.mxu0 0.0
  %1223 = vmatmul.mubr.f32.gmra.mrb[0].mxu0 %v760
  %v1224 = vpop.f32.mrb[0].mxu0
  %v1225 = vadd.f32 %v512, %v1224
  %v1226 = vpop.f32.mrb[0].mxu0
  %1227 = vmatprep.mubr.f32.mxu0 0.0
  %1228 = vmatmul.mubr.f32.gmra.mrb[0].mxu0 %v763
  %v1229 = vpop.f32.mrb[0].mxu0
  %v1230 = vadd.f32 %v517, %v1229
  %v1231 = vpop.f32.mrb[0].mxu0
  %1232 = vmatprep.mubr.f32.mxu0 0.0
  %1233 = vmatmul.mubr.f32.gmra.mrb[0].mxu0 %v766
  %v1234 = vpop.f32.mrb[0].mxu0
  %v1235 = vadd.f32 %v522, %v1234
  %v1236 = vpop.f32.mrb[0].mxu0
  %1237 = vmatprep.mubr.f32.mxu0 0.0
  %1238 = vmatmul.mubr.f32.gmra.mrb[0].mxu0 %v769
  %v1239 = vpop.f32.mrb[0].mxu0
  %v1240 = vadd.f32 %v527, %v1239
  %v1241 = vpop.f32.mrb[0].mxu0
  %1242 = vmatprep.mubr.f32.mxu0 0.0
  %1243 = vmatmul.mubr.f32.gmra.mrb[0].mxu0 %v772
  %v1244 = vpop.f32.mrb[0].mxu0
  %v1245 = vadd.f32 %v532, %v1244
  %v1246 = vpop.f32.mrb[0].mxu0
  %1247 = vmatprep.mubr.f32.mxu0 0.0
  %1248 = vmatmul.mubr.f32.gmra.mrb[0].mxu0 %v775
  %v1249 = vpop.f32.mrb[0].mxu0
  %v1250 = vadd.f32 %v537, %v1249
  %v1251 = vpop.f32.mrb[0].mxu0
  %1252 = vmatprep.mubr.f32.mxu0 0.0
  %1253 = vmatmul.mubr.f32.gmra.mrb[0].mxu0 %v778
  %v1254 = vpop.f32.mrb[0].mxu0
  %v1255 = vadd.f32 %v542, %v1254
  %v1256 = vpop.f32.mrb[0].mxu0
  %1257 = vmatprep.mubr.f32.mxu0 0.0
  %1258 = vmatmul.mubr.f32.gmra.mrb[0].mxu0 %v781
  %v1259 = vpop.f32.mrb[0].mxu0
  %v1260 = vadd.f32 %v547, %v1259
  %v1261 = vpop.f32.mrb[0].mxu0
  %1262 = vmatprep.mubr.f32.mxu0 0.0
  %1263 = vmatmul.mubr.f32.gmra.mrb[0].mxu0 %v784
  %v1264 = vpop.f32.mrb[0].mxu0
  %v1265 = vadd.f32 %v552, %v1264
  %v1266 = vpop.f32.mrb[0].mxu0
  %1267 = vmatprep.mubr.f32.mxu0 0.0
  %1268 = vmatmul.mubr.f32.gmra.mrb[0].mxu0 %v787
  %v1269 = vpop.f32.mrb[0].mxu0
  %v1270 = vadd.f32 %v557, %v1269
  %v1271 = vpop.f32.mrb[0].mxu0
  %1272 = vmatprep.mubr.f32.mxu0 0.0
  %1273 = vmatmul.mubr.f32.gmra.mrb[0].mxu0 %v790
  %v1274 = vpop.f32.mrb[0].mxu0
  %v1275 = vadd.f32 %v562, %v1274
  %v1276 = vpop.f32.mrb[0].mxu0
  %1277 = vmatprep.mubr.f32.mxu0 0.0
  %1278 = vmatmul.mubr.f32.gmra.mrb[0].mxu0 %v793
  %v1279 = vpop.f32.mrb[0].mxu0
  %v1280 = vadd.f32 %v567, %v1279
  %v1281 = vpop.f32.mrb[0].mxu0
  %1282 = vdwg.mxu0
  %v1283 = vmul.f32 %v910, 0.5
  %v1284 = vmul.f32 %v915, 0.5
  %v1285 = vmul.f32 %v920, 0.5
  %v1286 = vmul.f32 %v925, 0.5
  %v1287 = vmul.f32 %v930, 0.5
  %v1288 = vmul.f32 %v935, 0.5
  %v1289 = vmul.f32 %v940, 0.5
  %v1290 = vmul.f32 %v945, 0.5
  %v1291 = vmul.f32 %v950, 0.5
  %v1292 = vmul.f32 %v955, 0.5
  %v1293 = vmul.f32 %v960, 0.5
  %v1294 = vmul.f32 %v965, 0.5
  %v1295 = vmul.f32 %v970, 0.5
  %v1296 = vmul.f32 %v975, 0.5
  %v1297 = vmul.f32 %v980, 0.5
  %v1298 = vmul.f32 %v985, 0.5
  %v1299 = vmul.f32 %v990, 0.5
  %v1300 = vmul.f32 %v995, 0.5
  %v1301 = vmul.f32 %v1000, 0.5
  %v1302 = vmul.f32 %v1005, 0.5
  %v1303 = vmul.f32 %v1010, 0.5
  %v1304 = vmul.f32 %v1015, 0.5
  %v1305 = vmul.f32 %v1020, 0.5
  %v1306 = vmul.f32 %v1025, 0.5
  %v1307 = vmul.f32 %v1030, 0.5
  %v1308 = vmul.f32 %v1035, 0.5
  %v1309 = vmul.f32 %v1040, 0.5
  %v1310 = vmul.f32 %v1045, 0.5
  %v1311 = vmul.f32 %v1050, 0.5
  %v1312 = vmul.f32 %v1055, 0.5
  %v1313 = vmul.f32 %v1060, 0.5
  %v1314 = vmul.f32 %v1065, 0.5
  %v1315 = vmul.f32 %v1070, 0.5
  %v1316 = vmul.f32 %v1075, 0.5
  %v1317 = vmul.f32 %v1080, 0.5
  %v1318 = vmul.f32 %v1085, 0.5
  %v1319 = vmul.f32 %v1090, 0.5
  %v1320 = vmul.f32 %v1095, 0.5
  %v1321 = vmul.f32 %v1100, 0.5
  %v1322 = vmul.f32 %v1105, 0.5
  %v1323 = vmul.f32 %v1110, 0.5
  %v1324 = vmul.f32 %v1115, 0.5
  %v1325 = vmul.f32 %v1120, 0.5
  %v1326 = vmul.f32 %v1125, 0.5
  %v1327 = vmul.f32 %v1130, 0.5
  %v1328 = vmul.f32 %v1135, 0.5
  %v1329 = vmul.f32 %v1140, 0.5
  %v1330 = vmul.f32 %v1145, 0.5
  %v1331 = vmul.f32 %v1150, 0.5
  %v1332 = vmul.f32 %v1155, 0.5
  %v1333 = vtanh.pop %v1283
  %v1334 = vtanh.pop %v1284
  %v1335 = vtanh.pop %v1285
  %v1336 = vtanh.pop %v1286
  %v1337 = vtanh.pop %v1287
  %v1338 = vtanh.pop %v1288
  %v1339 = vtanh.pop %v1289
  %v1340 = vtanh.pop %v1290
  %v1341 = vtanh.pop %v1291
  %v1342 = vtanh.pop %v1292
  %v1343 = vtanh.pop %v1293
  %v1344 = vtanh.pop %v1294
  %v1345 = vtanh.pop %v1295
  %v1346 = vtanh.pop %v1296
  %v1347 = vtanh.pop %v1297
  %v1348 = vtanh.pop %v1298
  %v1349 = vtanh.pop %v1299
  %v1350 = vtanh.pop %v1300
  %v1351 = vtanh.pop %v1301
  %v1352 = vtanh.pop %v1302
  %v1353 = vtanh.pop %v1303
  %v1354 = vtanh.pop %v1304
  %v1355 = vtanh.pop %v1305
  %v1356 = vtanh.pop %v1306
  %v1357 = vtanh.pop %v1307
  %v1358 = vtanh.pop %v1308
  %v1359 = vtanh.pop %v1309
  %v1360 = vtanh.pop %v1310
  %v1361 = vtanh.pop %v1311
  %v1362 = vtanh.pop %v1312
  %v1363 = vtanh.pop %v1313
  %v1364 = vtanh.pop %v1314
  %v1365 = vtanh.pop %v1315
  %v1366 = vtanh.pop %v1316
  %v1367 = vtanh.pop %v1317
  %v1368 = vtanh.pop %v1318
  %v1369 = vtanh.pop %v1319
  %v1370 = vtanh.pop %v1320
  %v1371 = vtanh.pop %v1321
  %v1372 = vtanh.pop %v1322
  %v1373 = vtanh.pop %v1323
  %v1374 = vtanh.pop %v1324
  %v1375 = vtanh.pop %v1325
  %v1376 = vtanh.pop %v1326
  %v1377 = vtanh.pop %v1327
  %v1378 = vtanh.pop %v1328
  %v1379 = vtanh.pop %v1329
  %v1380 = vtanh.pop %v1330
  %v1381 = vtanh.pop %v1331
  %v1382 = vtanh.pop %v1332
  %v1383 = vmul.f32 %v1333, 0.5
  %v1384 = vmul.f32 %v1334, 0.5
  %v1385 = vmul.f32 %v1335, 0.5
  %v1386 = vmul.f32 %v1336, 0.5
  %v1387 = vmul.f32 %v1337, 0.5
  %v1388 = vmul.f32 %v1338, 0.5
  %v1389 = vmul.f32 %v1339, 0.5
  %v1390 = vmul.f32 %v1340, 0.5
  %v1391 = vmul.f32 %v1341, 0.5
  %v1392 = vmul.f32 %v1342, 0.5
  %v1393 = vmul.f32 %v1343, 0.5
  %v1394 = vmul.f32 %v1344, 0.5
  %v1395 = vmul.f32 %v1345, 0.5
  %v1396 = vmul.f32 %v1346, 0.5
  %v1397 = vmul.f32 %v1347, 0.5
  %v1398 = vmul.f32 %v1348, 0.5
  %v1399 = vmul.f32 %v1349, 0.5
  %v1400 = vmul.f32 %v1350, 0.5
  %v1401 = vmul.f32 %v1351, 0.5
  %v1402 = vmul.f32 %v1352, 0.5
  %v1403 = vmul.f32 %v1353, 0.5
  %v1404 = vmul.f32 %v1354, 0.5
  %v1405 = vmul.f32 %v1355, 0.5
  %v1406 = vmul.f32 %v1356, 0.5
  %v1407 = vmul.f32 %v1357, 0.5
  %v1408 = vmul.f32 %v1358, 0.5
  %v1409 = vmul.f32 %v1359, 0.5
  %v1410 = vmul.f32 %v1360, 0.5
  %v1411 = vmul.f32 %v1361, 0.5
  %v1412 = vmul.f32 %v1362, 0.5
  %v1413 = vmul.f32 %v1363, 0.5
  %v1414 = vmul.f32 %v1364, 0.5
  %v1415 = vmul.f32 %v1365, 0.5
  %v1416 = vmul.f32 %v1366, 0.5
  %v1417 = vmul.f32 %v1367, 0.5
  %v1418 = vmul.f32 %v1368, 0.5
  %v1419 = vmul.f32 %v1369, 0.5
  %v1420 = vmul.f32 %v1370, 0.5
  %v1421 = vmul.f32 %v1371, 0.5
  %v1422 = vmul.f32 %v1372, 0.5
  %v1423 = vmul.f32 %v1373, 0.5
  %v1424 = vmul.f32 %v1374, 0.5
  %v1425 = vmul.f32 %v1375, 0.5
  %v1426 = vmul.f32 %v1376, 0.5
  %v1427 = vmul.f32 %v1377, 0.5
  %v1428 = vmul.f32 %v1378, 0.5
  %v1429 = vmul.f32 %v1379, 0.5
  %v1430 = vmul.f32 %v1380, 0.5
  %v1431 = vmul.f32 %v1381, 0.5
  %v1432 = vmul.f32 %v1382, 0.5
  %v1433 = vadd.f32 %v1383, 0.5
  %v1434 = vadd.f32 %v1384, 0.5
  %v1435 = vadd.f32 %v1385, 0.5
  %v1436 = vadd.f32 %v1386, 0.5
  %v1437 = vadd.f32 %v1387, 0.5
  %v1438 = vadd.f32 %v1388, 0.5
  %v1439 = vadd.f32 %v1389, 0.5
  %v1440 = vadd.f32 %v1390, 0.5
  %v1441 = vadd.f32 %v1391, 0.5
  %v1442 = vadd.f32 %v1392, 0.5
  %v1443 = vadd.f32 %v1393, 0.5
  %v1444 = vadd.f32 %v1394, 0.5
  %v1445 = vadd.f32 %v1395, 0.5
  %v1446 = vadd.f32 %v1396, 0.5
  %v1447 = vadd.f32 %v1397, 0.5
  %v1448 = vadd.f32 %v1398, 0.5
  %v1449 = vadd.f32 %v1399, 0.5
  %v1450 = vadd.f32 %v1400, 0.5
  %v1451 = vadd.f32 %v1401, 0.5
  %v1452 = vadd.f32 %v1402, 0.5
  %v1453 = vadd.f32 %v1403, 0.5
  %v1454 = vadd.f32 %v1404, 0.5
  %v1455 = vadd.f32 %v1405, 0.5
  %v1456 = vadd.f32 %v1406, 0.5
  %v1457 = vadd.f32 %v1407, 0.5
  %v1458 = vadd.f32 %v1408, 0.5
  %v1459 = vadd.f32 %v1409, 0.5
  %v1460 = vadd.f32 %v1410, 0.5
  %v1461 = vadd.f32 %v1411, 0.5
  %v1462 = vadd.f32 %v1412, 0.5
  %v1463 = vadd.f32 %v1413, 0.5
  %v1464 = vadd.f32 %v1414, 0.5
  %v1465 = vadd.f32 %v1415, 0.5
  %v1466 = vadd.f32 %v1416, 0.5
  %v1467 = vadd.f32 %v1417, 0.5
  %v1468 = vadd.f32 %v1418, 0.5
  %v1469 = vadd.f32 %v1419, 0.5
  %v1470 = vadd.f32 %v1420, 0.5
  %v1471 = vadd.f32 %v1421, 0.5
  %v1472 = vadd.f32 %v1422, 0.5
  %v1473 = vadd.f32 %v1423, 0.5
  %v1474 = vadd.f32 %v1424, 0.5
  %v1475 = vadd.f32 %v1425, 0.5
  %v1476 = vadd.f32 %v1426, 0.5
  %v1477 = vadd.f32 %v1427, 0.5
  %v1478 = vadd.f32 %v1428, 0.5
  %v1479 = vadd.f32 %v1429, 0.5
  %v1480 = vadd.f32 %v1430, 0.5
  %v1481 = vadd.f32 %v1431, 0.5
  %v1482 = vadd.f32 %v1432, 0.5
  %v1483 = vtanh.pop %v1160
  %v1484 = vtanh.pop %v1165
  %v1485 = vtanh.pop %v1170
  %v1486 = vtanh.pop %v1175
  %v1487 = vtanh.pop %v1180
  %v1488 = vtanh.pop %v1185
  %v1489 = vtanh.pop %v1190
  %v1490 = vtanh.pop %v1195
  %v1491 = vtanh.pop %v1200
  %v1492 = vtanh.pop %v1205
  %v1493 = vtanh.pop %v1210
  %v1494 = vtanh.pop %v1215
  %v1495 = vtanh.pop %v1220
  %v1496 = vtanh.pop %v1225
  %v1497 = vtanh.pop %v1230
  %v1498 = vtanh.pop %v1235
  %v1499 = vtanh.pop %v1240
  %v1500 = vtanh.pop %v1245
  %v1501 = vtanh.pop %v1250
  %v1502 = vtanh.pop %v1255
  %v1503 = vtanh.pop %v1260
  %v1504 = vtanh.pop %v1265
  %v1505 = vtanh.pop %v1270
  %v1506 = vtanh.pop %v1275
  %v1507 = vtanh.pop %v1280
  %v1508 = vmul.f32 %v1433, %v1483
  %v1509 = vmul.f32 %v1434, %v1484
  %v1510 = vmul.f32 %v1435, %v1485
  %v1511 = vmul.f32 %v1436, %v1486
  %v1512 = vmul.f32 %v1437, %v1487
  %v1513 = vmul.f32 %v1438, %v1488
  %v1514 = vmul.f32 %v1439, %v1489
  %v1515 = vmul.f32 %v1440, %v1490
  %v1516 = vmul.f32 %v1441, %v1491
  %v1517 = vmul.f32 %v1442, %v1492
  %v1518 = vmul.f32 %v1443, %v1493
  %v1519 = vmul.f32 %v1444, %v1494
  %v1520 = vmul.f32 %v1445, %v1495
  %v1521 = vmul.f32 %v1446, %v1496
  %v1522 = vmul.f32 %v1447, %v1497
  %v1523 = vmul.f32 %v1448, %v1498
  %v1524 = vmul.f32 %v1449, %v1499
  %v1525 = vmul.f32 %v1450, %v1500
  %v1526 = vmul.f32 %v1451, %v1501
  %v1527 = vmul.f32 %v1452, %v1502
  %v1528 = vmul.f32 %v1453, %v1503
  %v1529 = vmul.f32 %v1454, %v1504
  %v1530 = vmul.f32 %v1455, %v1505
  %v1531 = vmul.f32 %v1456, %v1506
  %v1532 = vmul.f32 %v1457, %v1507
  %v1533 = vtanh.pop %v1508
  %v1534 = vtanh.pop %v1509
  %v1535 = vtanh.pop %v1510
  %v1536 = vtanh.pop %v1511
  %v1537 = vtanh.pop %v1512
  %v1538 = vtanh.pop %v1513
  %v1539 = vtanh.pop %v1514
  %v1540 = vtanh.pop %v1515
  %v1541 = vtanh.pop %v1516
  %v1542 = vtanh.pop %v1517
  %v1543 = vtanh.pop %v1518
  %v1544 = vtanh.pop %v1519
  %v1545 = vtanh.pop %v1520
  %v1546 = vtanh.pop %v1521
  %v1547 = vtanh.pop %v1522
  %v1548 = vtanh.pop %v1523
  %v1549 = vtanh.pop %v1524
  %v1550 = vtanh.pop %v1525
  %v1551 = vtanh.pop %v1526
  %v1552 = vtanh.pop %v1527
  %v1553 = vtanh.pop %v1528
  %v1554 = vtanh.pop %v1529
  %v1555 = vtanh.pop %v1530
  %v1556 = vtanh.pop %v1531
  %v1557 = vtanh.pop %v1532
  %v1558 = vmul.f32 %v1458, %v1533
  %v1559 = vmul.f32 %v1459, %v1534
  %v1560 = vmul.f32 %v1460, %v1535
  %v1561 = vmul.f32 %v1461, %v1536
  %v1562 = vmul.f32 %v1462, %v1537
  %v1563 = vmul.f32 %v1463, %v1538
  %v1564 = vmul.f32 %v1464, %v1539
  %v1565 = vmul.f32 %v1465, %v1540
  %v1566 = vmul.f32 %v1466, %v1541
  %v1567 = vmul.f32 %v1467, %v1542
  %v1568 = vmul.f32 %v1468, %v1543
  %v1569 = vmul.f32 %v1469, %v1544
  %v1570 = vmul.f32 %v1470, %v1545
  %v1571 = vmul.f32 %v1471, %v1546
  %v1572 = vmul.f32 %v1472, %v1547
  %v1573 = vmul.f32 %v1473, %v1548
  %v1574 = vmul.f32 %v1474, %v1549
  %v1575 = vmul.f32 %v1475, %v1550
  %v1576 = vmul.f32 %v1476, %v1551
  %v1577 = vmul.f32 %v1477, %v1552
  %v1578 = vmul.f32 %v1478, %v1553
  %v1579 = vmul.f32 %v1479, %v1554
  %v1580 = vmul.f32 %v1480, %v1555
  %v1581 = vmul.f32 %v1481, %v1556
  %v1582 = vmul.f32 %v1482, %v1557
  %v1583 = vld [vmem:[%s3] sm:$0xff]
  %v1584 = vld [vmem:[%s3 + $0x8] sm:$0xff]
  %v1585 = vld [vmem:[%s3 + $0x10] sm:$0xff]
  %v1586 = vld [vmem:[%s3 + $0x18] sm:$0xff]
  %v1587 = vld [vmem:[%s3 + $0x20] sm:$0xff]
  %v1588 = vld [vmem:[%s3 + $0x28] sm:$0xff]
  %v1589 = vld [vmem:[%s3 + $0x30] sm:$0xff]
  %v1590 = vld [vmem:[%s3 + $0x38] sm:$0xff]
  %v1591 = vld [vmem:[%s3 + $0x40] sm:$0xff]
  %v1592 = vld [vmem:[%s3 + $0x48] sm:$0xff]
  %v1593 = vld [vmem:[%s4] sm:$0xff]
  %v1594 = vld [vmem:[%s4 + $0x8] sm:$0xff]
  %v1595 = vld [vmem:[%s4 + $0x10] sm:$0xff]
  %v1596 = vld [vmem:[%s4 + $0x18] sm:$0xff]
  %v1597 = vld [vmem:[%s4 + $0x20] sm:$0xff]
  %1599 = vset.pattern.permute.xlu0 0
  %1600 = vperm.xlu0 %1599, %v1593
  %v1601 = vpop.permute.xlu0 %1600
  %1604 = vset.pattern.permute.xlu0 0
  %1605 = vperm.xlu0 %1604, %v1594
  %v1606 = vpop.permute.xlu0 %1605
  %1609 = vset.pattern.permute.xlu0 0
  %1610 = vperm.xlu0 %1609, %v1595
  %v1611 = vpop.permute.xlu0 %1610
  %1614 = vset.pattern.permute.xlu0 0
  %1615 = vperm.xlu0 %1614, %v1596
  %v1616 = vpop.permute.xlu0 %1615
  %1619 = vset.pattern.permute.xlu0 0
  %1620 = vperm.xlu0 %1619, %v1597
  %v1621 = vpop.permute.xlu0 %1620
  %vm1623 = vcmask 588800
  %v1625 = vsel %vm1623, %v1584, 0
  %v1628 = vsel %vm1623, %v1586, 0
  %v1631 = vsel %vm1623, %v1588, 0
  %v1634 = vsel %vm1623, %v1590, 0
  %v1637 = vsel %vm1623, %v1592, 0
  %1639 = vmatprep.subr.mxu0 0.0
  %1640 = vmatpush1.msra.mxu0 %v1558
  %1641 = vmatprep.subr.mxu0 0.0
  %1642 = vmatpush1.msra.mxu0 %v1559
  %1643 = vmatprep.subr.mxu0 0.0
  %1644 = vmatpush1.msra.mxu0 %v1560
  %1645 = vmatprep.subr.mxu0 0.0
  %1646 = vmatpush1.msra.mxu0 %v1561
  %1647 = vmatprep.subr.mxu0 0.0
  %1648 = vmatpush1.msra.mxu0 %v1562
  %1649 = vmatprep.subr.mxu0 0.0
  %1650 = vmatpush1.msra.mxu0 %v1563
  %1651 = vmatprep.subr.mxu0 0.0
  %1652 = vmatpush1.msra.mxu0 %v1564
  %1653 = vmatprep.subr.mxu0 0.0
  %1654 = vmatpush1.msra.mxu0 %v1565
  %1655 = vmatprep.subr.mxu0 0.0
  %1656 = vmatpush1.msra.mxu0 %v1566
  %1657 = vmatprep.subr.mxu0 0.0
  %1658 = vmatpush1.msra.mxu0 %v1567
  %1659 = vmatprep.subr.mxu0 0.0
  %1660 = vmatpush1.msra.mxu0 %v1568
  %1661 = vmatprep.subr.mxu0 0.0
  %1662 = vmatpush1.msra.mxu0 %v1569
  %1663 = vmatprep.subr.mxu0 0.0
  %1664 = vmatpush1.msra.mxu0 %v1570
  %1665 = vmatprep.subr.mxu0 0.0
  %1666 = vmatpush1.msra.mxu0 %v1571
  %1667 = vmatprep.subr.mxu0 0.0
  %1668 = vmatpush1.msra.mxu0 %v1572
  %1669 = vmatprep.subr.mxu0 0.0
  %1670 = vmatpush1.msra.mxu0 %v1573
  %1671 = vmatprep.subr.mxu0 0.0
  %1672 = vmatpush1.msra.mxu0 %v1574
  %1673 = vmatprep.subr.mxu0 0.0
  %1674 = vmatpush1.msra.mxu0 %v1575
  %1675 = vmatprep.subr.mxu0 0.0
  %1676 = vmatpush1.msra.mxu0 %v1576
  %1677 = vmatprep.subr.mxu0 0.0
  %1678 = vmatpush1.msra.mxu0 %v1577
  %1679 = vmatprep.subr.mxu0 0.0
  %1680 = vmatpush1.msra.mxu0 %v1578
  %1681 = vmatprep.subr.mxu0 0.0
  %1682 = vmatpush1.msra.mxu0 %v1579
  %1683 = vmatprep.subr.mxu0 0.0
  %1684 = vmatpush1.msra.mxu0 %v1580
  %1685 = vmatprep.subr.mxu0 0.0
  %1686 = vmatpush1.msra.mxu0 %v1581
  %1687 = vmatprep.subr.mxu0 0.0
  %1688 = vmatpush1.msra.mxu0 %v1582
  %1689 = vmatprep.subr.mxu0 0.0
  %1690 = vmatpush1.msra.mxu0 0.0
  %1691 = vmatprep.subr.mxu0 0.0
  %1692 = vmatpush1.msra.mxu0 0.0
  %1693 = vmatprep.subr.mxu0 0.0
  %1694 = vmatpush1.msra.mxu0 0.0
  %1695 = vmatprep.subr.mxu0 0.0
  %1696 = vmatpush1.msra.mxu0 0.0
  %1697 = vmatprep.subr.mxu0 0.0
  %1698 = vmatpush1.msra.mxu0 0.0
  %1699 = vmatprep.subr.mxu0 0.0
  %1700 = vmatpush1.msra.mxu0 0.0
  %1701 = vmatprep.subr.mxu0 0.0
  %1702 = vmatpush1.msra.mxu0 0.0
  %1703 = vmatprep.mubr.f32.mxu0 %v1625
  %1704 = vmatmul.mubr.f32.gmra.mrb[0].mxu0 %v1583
  %v1705 = vpop.f32.mrb[0].mxu0
  %v1706 = vadd.f32 %v1601, %v1705
  %v1707 = vpop.f32.mrb[0].mxu0
  %1708 = vmatprep.mubr.f32.mxu0 %v1628
  %1709 = vmatmul.mubr.f32.gmra.mrb[0].mxu0 %v1585
  %v1710 = vpop.f32.mrb[0].mxu0
  %v1711 = vadd.f32 %v1606, %v1710
  %v1712 = vpop.f32.mrb[0].mxu0
  %1713 = vmatprep.mubr.f32.mxu0 %v1631
  %1714 = vmatmul.mubr.f32.gmra.mrb[0].mxu0 %v1587
  %v1715 = vpop.f32.mrb[0].mxu0
  %v1716 = vadd.f32 %v1611, %v1715
  %v1717 = vpop.f32.mrb[0].mxu0
  %1718 = vmatprep.mubr.f32.mxu0 %v1634
  %1719 = vmatmul.mubr.f32.gmra.mrb[0].mxu0 %v1589
  %v1720 = vpop.f32.mrb[0].mxu0
  %v1721 = vadd.f32 %v1616, %v1720
  %v1722 = vpop.f32.mrb[0].mxu0
  %1723 = vmatprep.mubr.f32.mxu0 %v1637
  %1724 = vmatmul.mubr.f32.gmra.mrb[0].mxu0 %v1591
  %v1725 = vpop.f32.mrb[0].mxu0
  %v1726 = vadd.f32 %v1621, %v1725
  %v1727 = vpop.f32.mrb[0].mxu0
  %1728 = vdwg.mxu0
  %v1729 = vmax.f32 %v1706, 0.0
  %v1730 = vmax.f32 %v1711, 0.0
  %v1731 = vmax.f32 %v1716, 0.0
  %v1732 = vmax.f32 %v1721, 0.0
  %v1733 = vmax.f32 %v1726, 0.0
  %v1734 = vld [vmem:[%s5] sm:$0xff]
  %v1735 = vld [vmem:[%s5 + $0x8] sm:$0xff]
  %v1736 = vld [vmem:[%s5 + $0x10] sm:$0xff]
  %v1737 = vld [vmem:[%s5 + $0x18] sm:$0xff]
  %v1738 = vld [vmem:[%s5 + $0x20] sm:$0xff]
  %1740 = vset.pattern.permute.xlu0 0
  %1741 = vperm.xlu0 %1740, %v1734
  %v1742 = vpop.permute.xlu0 %1741
  %1745 = vset.pattern.permute.xlu0 0
  %1746 = vperm.xlu0 %1745, %v1735
  %v1747 = vpop.permute.xlu0 %1746
  %1750 = vset.pattern.permute.xlu0 0
  %1751 = vperm.xlu0 %1750, %v1736
  %v1752 = vpop.permute.xlu0 %1751
  %1755 = vset.pattern.permute.xlu0 0
  %1756 = vperm.xlu0 %1755, %v1737
  %v1757 = vpop.permute.xlu0 %1756
  %1760 = vset.pattern.permute.xlu0 0
  %1761 = vperm.xlu0 %1760, %v1738
  %v1762 = vpop.permute.xlu0 %1761
  %v1764 = vmul.f32 %v1742, %v1729
  %v1765 = vmul.f32 %v1747, %v1730
  %v1766 = vmul.f32 %v1752, %v1731
  %v1767 = vmul.f32 %v1757, %v1732
  %v1768 = vmul.f32 %v1762, %v1733
  %v1769 = vadd.f32 %v1764, %v1765
  %v1770 = vadd.f32 %v1769, %v1766
  %v1771 = vadd.f32 %v1770, %v1767
  %v1772 = vadd.f32 %v1771, %v1768
  %v1773 = vrot.slane %v1772, 4
  %v1774 = vadd.f32 %v1772, %v1773
  %v1775 = vrot.slane %v1774, 2
  %v1776 = vadd.f32 %v1774, %v1775
  %v1777 = vrot.slane %v1776, 1
  %v1778 = vadd.f32 %v1776, %v1777
  %v1779 = vld [vmem:[#allocation2] sm:$0x1]
  %1781 = vset.pattern.permute.xlu0 0
  %1782 = vperm.xlu0 %1781, %v1779
  %v1783 = vpop.permute.xlu0 %1782
  %v1785 = vlaneseq
  %v1786 = vshrl.u32 %v1785, 7
  %v1787 = vsub.s32 0, %v1786
  %v1788 = vrot.slane %v1783, %v1787
  %v1789 = vadd.f32 %v1778, %v1788
  %v1790 = vtanh.pop %v1789
  %1791 = vst [vmem:[%s7] sm:$0x1] %v1790
  // Predicated region
  $region30: #{classifier_lstm_forward.1} parent=0 // pred_check
    _
  $region31: #{classifier_lstm_forward.1} parent=0 // pred_check_branch
    %1793 = sbr.rel (0) target = $region33
  $region32: #{classifier_lstm_forward.1} parent=0 // pred_region
    _
  $region33: #{classifier_lstm_forward.1} parent=0 // pred_fallthru
    _
  // Predicated region
  $region34: #{classifier_lstm_forward.1} parent=0 // pred_check
    _
  $region35: #{classifier_lstm_forward.1} parent=0 // pred_check_branch
    %1795 = sbr.rel (0) target = $region37
  $region36: #{classifier_lstm_forward.1} parent=0 // pred_region
    _
  $region37: #{classifier_lstm_forward.1} parent=0 // pred_fallthru
    _

</llo_original>
